<compile_context>
chip_gen: v5e
topology: v5e:2x2
jax: 0.10.0
libtpu: 0.0.40
codegen_flags: <defaults>
</compile_context>

<pallas_src>
import functools

import jax
import jax.numpy as jnp
import numpy as np
from jax.experimental import pallas as pl
from jax.experimental.pallas import tpu as pltpu

# --- model hyperparameters (256 / 512 are hardcoded in the PyTorch module) ---
NUM_ACOUSTIC_PARAMETERS = 8
NUM_PHONEME_LOGITS = 40
C1 = 256                       # conv hidden channels
H = 512                        # classifier hidden width
K = 5                          # Conv1d kernel size
L_IN = 9                       # sequence length (forced: conv output length 1)
L1 = L_IN - (K - 1)            # = 5, spatial length after conv1
X_DIM = L_IN * NUM_ACOUSTIC_PARAMETERS          # 72
HID1 = L1 * C1                                  # 1280
N_CLASSES_PAD = 128            # class dim padded to one full lane register
BN_EPS = 1e-5
DEFAULT_TB = 512               # batch tile, sized for v7x's 64 MiB VMEM

# TODO(synk): BatchNorm1d is implemented in inference mode (running statistics
# folded into a per-channel affine); training-mode batch statistics are not
# reproduced.
# TODO(synk): weights are kept f32 so the 1e-4/1e-5 reference check holds;
# casting w1t/w2f/w3 to bf16 (f32 accumulate) is a further MXU/DMA win on
# v6e/v7x.


def _convnet_kernel(x_ref, w1_ref, s1_ref, t1_ref,
                    w2_ref, s2_ref, t2_ref,
                    w3_ref, b3_ref, w4_ref, b4_ref, out_ref):
    x = x_ref[...]                                               # (TB, 72)

    # conv1 (all 5 output positions at once) + folded BN + ReLU
    h1 = jnp.dot(x, w1_ref[...], preferred_element_type=jnp.float32)   # (TB,1280)
    h1 = jnp.maximum(h1 * s1_ref[...] + t1_ref[...], 0.0)

    # conv2 (single output position) + folded BN + ReLU
    h2 = jnp.dot(h1, w2_ref[...], preferred_element_type=jnp.float32)  # (TB,256)
    h2 = jnp.maximum(h2 * s2_ref[...] + t2_ref[...], 0.0)

    # classifier: Linear(256,512) + ReLU + Linear(512, 128-padded classes)
    z = jnp.dot(h2, w3_ref[...], preferred_element_type=jnp.float32) + b3_ref[...]
    z = jnp.maximum(z, 0.0)
    logits = jnp.dot(z, w4_ref[...], preferred_element_type=jnp.float32) + b4_ref[...]

    # softmax (padded columns carry -1e30 bias -> exp == 0, exact result)
    m = jnp.max(logits, axis=-1, keepdims=True)
    e = jnp.exp(logits - m)
    out_ref[...] = e / jnp.sum(e, axis=-1, keepdims=True)


def _round_up(n, m):
    return ((n + m - 1) // m) * m


@functools.partial(jax.jit, static_argnames=("tb",))
def convnet_forward(x, kparams, tb=DEFAULT_TB):
    """x: (B, L_IN, NUM_ACOUSTIC_PARAMETERS) float32. Returns (None, probs)."""
    (w1t, s1t, t1t, w2f, s2, t2, w3, b3, w4p, b4p) = kparams
    B = x.shape[0]
    x2 = x.reshape(B, X_DIM).astype(jnp.float32)                 # (B, 72)

    tb = min(int(tb), _round_up(B, 8))
    B_pad = _round_up(B, tb)
    if B_pad != B:
        x2 = jnp.pad(x2, ((0, B_pad - B), (0, 0)))
    grid = (B_pad // tb,)

    weight_bytes = sum(int(np.prod(a.shape)) * 4 for a in kparams)
    cost = pl.CostEstimate(
        flops=2 * B_pad * (X_DIM * HID1 + HID1 * C1 + C1 * H + H * N_CLASSES_PAD),
        transcendentals=B_pad * N_CLASSES_PAD,
        bytes_accessed=weight_bytes + B_pad * (X_DIM + N_CLASSES_PAD) * 4,
    )

    const2d = lambda i: (0, 0)
    probs_pad = pl.pallas_call(
        _convnet_kernel,
        out_shape=jax.ShapeDtypeStruct((B_pad, N_CLASSES_PAD), jnp.float32),
        grid=grid,
        in_specs=[
            pl.BlockSpec((tb, X_DIM), lambda i: (i, 0)),         # x block (pipelined)
            pl.BlockSpec(w1t.shape, const2d),                    # weights: resident
            pl.BlockSpec(s1t.shape, const2d),
            pl.BlockSpec(t1t.shape, const2d),
            pl.BlockSpec(w2f.shape, const2d),
            pl.BlockSpec(s2.shape, const2d),
            pl.BlockSpec(t2.shape, const2d),
            pl.BlockSpec(w3.shape, const2d),
            pl.BlockSpec(b3.shape, const2d),
            pl.BlockSpec(w4p.shape, const2d),
            pl.BlockSpec(b4p.shape, const2d),
        ],
        out_specs=pl.BlockSpec((tb, N_CLASSES_PAD), lambda i: (i, 0)),
        compiler_params=pltpu.CompilerParams(
            dimension_semantics=("parallel",),
            vmem_limit_bytes=32 * 1024 * 1024,
        ),
        cost_estimate=cost,
    )(x2, *kparams)

    return (None, probs_pad[:B, :NUM_PHONEME_LOGITS])


# --- deterministic parameter init (PyTorch-default-style uniform fan-in) -----
def init_raw_params(key):
    ks = jax.random.split(key, 12)

    def u(k, shape, fan_in):
        b = 1.0 / np.sqrt(fan_in)
        return jax.random.uniform(k, shape, jnp.float32, -b, b)

    p = {}
    p['conv1_w'] = u(ks[0], (C1, NUM_ACOUSTIC_PARAMETERS, K), NUM_ACOUSTIC_PARAMETERS * K)
    p['conv1_b'] = u(ks[1], (C1,), NUM_ACOUSTIC_PARAMETERS * K)
    p['bn1_g'] = jnp.ones((C1,), jnp.float32)
    p['bn1_b'] = jnp.zeros((C1,), jnp.float32)
    p['bn1_m'] = 0.1 * jax.random.normal(ks[2], (C1,), jnp.float32)
    p['bn1_v'] = 1.0 + 0.1 * jax.random.uniform(ks[3], (C1,), jnp.float32)
    p['conv2_w'] = u(ks[4], (C1, C1, K), C1 * K)
    p['conv2_b'] = u(ks[5], (C1,), C1 * K)
    p['bn2_g'] = jnp.ones((C1,), jnp.float32)
    p['bn2_b'] = jnp.zeros((C1,), jnp.float32)
    p['bn2_m'] = 0.1 * jax.random.normal(ks[6], (C1,), jnp.float32)
    p['bn2_v'] = 1.0 + 0.1 * jax.random.uniform(ks[7], (C1,), jnp.float32)
    p['fc1_w'] = u(ks[8], (H, C1), C1)
    p['fc1_b'] = u(ks[9], (H,), C1)
    p['fc2_w'] = u(ks[10], (NUM_PHONEME_LOGITS, H), H)
    p['fc2_b'] = u(ks[11], (NUM_PHONEME_LOGITS,), H)
    return p


def fold_params(p):
    """Fold conv bias + eval-mode BatchNorm into per-channel scale/shift and
    reshape the convs into the kernel's fused matmul layouts."""
    def bn_fold(gamma, beta, mean, var, conv_b):
        scale = gamma / jnp.sqrt(var + BN_EPS)
        shift = beta + (conv_b - mean) * scale
        return scale, shift

    # conv1 -> block-Toeplitz (72, 1280): column block l is output position l.
    w1_taps = jnp.transpose(p['conv1_w'], (2, 1, 0))             # (K, C_in, C1)
    w1t = jnp.zeros((X_DIM, HID1), jnp.float32)
    for l in range(L1):
        for k in range(K):
            r0 = (l + k) * NUM_ACOUSTIC_PARAMETERS
            c0 = l * C1
            w1t = w1t.at[r0:r0 + NUM_ACOUSTIC_PARAMETERS, c0:c0 + C1].set(w1_taps[k])
    s1, t1 = bn_fold(p['bn1_g'], p['bn1_b'], p['bn1_m'], p['bn1_v'], p['conv1_b'])
    s1t = jnp.tile(s1, (L1,)).reshape(1, HID1)
    t1t = jnp.tile(t1, (L1,)).reshape(1, HID1)

    # conv2 -> (1280, 256): tap k multiplies h1 position k (row block k).
    w2_taps = jnp.transpose(p['conv2_w'], (2, 1, 0))             # (K, C1, C1)
    w2f = w2_taps.reshape(K * C1, C1)
    s2, t2 = bn_fold(p['bn2_g'], p['bn2_b'], p['bn2_m'], p['bn2_v'], p['conv2_b'])
    s2 = s2.reshape(1, C1)
    t2 = t2.reshape(1, C1)

    w3 = p['fc1_w'].T                                            # (256, 512)
    b3 = p['fc1_b'].reshape(1, -1)

    # classifier head padded 40 -> 128 classes for lane-dense stores.
    w4 = p['fc2_w'].T                                            # (512, 40)
    w4p = jnp.zeros((H, N_CLASSES_PAD), jnp.float32).at[:, :NUM_PHONEME_LOGITS].set(w4)
    b4p = jnp.full((1, N_CLASSES_PAD), -1e30, jnp.float32)
    b4p = b4p.at[0, :NUM_PHONEME_LOGITS].set(p['fc2_b'])
    return (w1t, s1t, t1t, w2f, s2, t2, w3, b3, w4p, b4p)


# --- pure-JAX reference (mirrors the PyTorch forward, eval-mode BN) ----------
def reference_forward(x, p):
    xp = jnp.transpose(x, (0, 2, 1))   # (B, C_in, L)  == x.permute(0, 2, 1)

    def conv1d(h, w, b):
        y = jax.lax.conv_general_dilated(h, w, window_strides=(1,),
                                         padding='VALID',
                                         dimension_numbers=('NCH', 'OIH', 'NCH'))
        return y + b[None, :, None]

    def bn(h, g, be, m, v):
        return (h - m[None, :, None]) / jnp.sqrt(v[None, :, None] + BN_EPS) \
            * g[None, :, None] + be[None, :, None]

    h = jax.nn.relu(bn(conv1d(xp, p['conv1_w'], p['conv1_b']),
                       p['bn1_g'], p['bn1_b'], p['bn1_m'], p['bn1_v']))
    h = jax.nn.relu(bn(conv1d(h, p['conv2_w'], p['conv2_b']),
                       p['bn2_g'], p['bn2_b'], p['bn2_m'], p['bn2_v']))
    h = h.reshape(h.shape[0], -1)                      # flatten(1) -> (B, 256)
    z = jax.nn.relu(h @ p['fc1_w'].T + p['fc1_b'])
    logits = z @ p['fc2_w'].T + p['fc2_b']
    return jax.nn.softmax(logits, axis=-1)


if __name__ == "__main__":
    key = jax.random.PRNGKey(0)
    pkey, xkey, xkey2 = jax.random.split(key, 3)
    raw = init_raw_params(pkey)
    kparams = fold_params(raw)

    # small primary check (B=2, single grid step)
    B = 2
    x = jax.random.normal(xkey, (B, L_IN, NUM_ACOUSTIC_PARAMETERS), jnp.float32)
    _, pred = convnet_forward(x, kparams)
    pred = jax.block_until_ready(pred)
    ref = reference_forward(x, raw)
    np.testing.assert_allclose(np.asarray(pred), np.asarray(ref),
                               rtol=1e-4, atol=1e-5)
    assert pred.shape == (B, NUM_PHONEME_LOGITS)

    # secondary check exercising multiple pipelined grid steps (tb=8, grid=3)
    B2 = 24
    x2 = jax.random.normal(xkey2, (B2, L_IN, NUM_ACOUSTIC_PARAMETERS), jnp.float32)
    _, pred2 = convnet_forward(x2, kparams, tb=8)
    pred2 = jax.block_until_ready(pred2)
    ref2 = reference_forward(x2, raw)
    np.testing.assert_allclose(np.asarray(pred2), np.asarray(ref2),
                               rtol=1e-4, atol=1e-5)
    assert pred2.shape == (B2, NUM_PHONEME_LOGITS)

    print("KERNEL_OK")
</pallas_src>

<mosaic_0001>
module attributes {stable_mosaic.version = 11 : i64} {
  func.func @_convnet_kernel(%arg0: i32, %arg1: memref<8x72xf32, #tpu.memory_space<vmem>>, %arg2: memref<72x1280xf32, #tpu.memory_space<vmem>>, %arg3: memref<1x1280xf32, #tpu.memory_space<vmem>>, %arg4: memref<1x1280xf32, #tpu.memory_space<vmem>>, %arg5: memref<1280x256xf32, #tpu.memory_space<vmem>>, %arg6: memref<1x256xf32, #tpu.memory_space<vmem>>, %arg7: memref<1x256xf32, #tpu.memory_space<vmem>>, %arg8: memref<256x512xf32, #tpu.memory_space<vmem>>, %arg9: memref<1x512xf32, #tpu.memory_space<vmem>>, %arg10: memref<512x128xf32, #tpu.memory_space<vmem>>, %arg11: memref<1x128xf32, #tpu.memory_space<vmem>>, %arg12: memref<8x128xf32, #tpu.memory_space<vmem>>) attributes {dimension_semantics = [#tpu.dimension_semantics<parallel>], iteration_bounds = array<i64: 1>, scalar_prefetch = 0 : i64, scratch_operands = 0 : i64, tpu.core_type = #tpu.core_type<tc>, window_params = [{transform_indices = @transform_0, window_bounds = array<i64: 8, 72>}, {pipeline_mode = #tpu.pipeline_mode<synchronous>, transform_indices = @transform_1, window_bounds = array<i64: 72, 1280>}, {pipeline_mode = #tpu.pipeline_mode<synchronous>, transform_indices = @transform_2, window_bounds = array<i64: 1, 1280>}, {pipeline_mode = #tpu.pipeline_mode<synchronous>, transform_indices = @transform_3, window_bounds = array<i64: 1, 1280>}, {pipeline_mode = #tpu.pipeline_mode<synchronous>, transform_indices = @transform_4, window_bounds = array<i64: 1280, 256>}, {pipeline_mode = #tpu.pipeline_mode<synchronous>, transform_indices = @transform_5, window_bounds = array<i64: 1, 256>}, {pipeline_mode = #tpu.pipeline_mode<synchronous>, transform_indices = @transform_6, window_bounds = array<i64: 1, 256>}, {pipeline_mode = #tpu.pipeline_mode<synchronous>, transform_indices = @transform_7, window_bounds = array<i64: 256, 512>}, {pipeline_mode = #tpu.pipeline_mode<synchronous>, transform_indices = @transform_8, window_bounds = array<i64: 1, 512>}, {pipeline_mode = #tpu.pipeline_mode<synchronous>, transform_indices = @transform_9, window_bounds = array<i64: 512, 128>}, {pipeline_mode = #tpu.pipeline_mode<synchronous>, transform_indices = @transform_10, window_bounds = array<i64: 1, 128>}, {transform_indices = @transform_11, window_bounds = array<i64: 8, 128>}]} {
    %c0 = arith.constant 0 : index
    %c0_0 = arith.constant 0 : index
    %0 = vector.load %arg1[%c0, %c0_0] : memref<8x72xf32, #tpu.memory_space<vmem>>, vector<8x72xf32>
    %c0_1 = arith.constant 0 : index
    %c0_2 = arith.constant 0 : index
    %1 = vector.load %arg2[%c0_1, %c0_2] : memref<72x1280xf32, #tpu.memory_space<vmem>>, vector<72x1280xf32>
    %cst = arith.constant dense<0.000000e+00> : vector<8x1280xf32>
    %2 = tpu.matmul %0, %1, %cst {dimension_numbers = #tpu.dot_dimension_numbers<[1], [0], [0], [1], [0, 0, 1, 1], [], []>} : vector<8x72xf32>, vector<72x1280xf32>, vector<8x1280xf32> -> vector<8x1280xf32>
    %c0_3 = arith.constant 0 : index
    %c0_4 = arith.constant 0 : index
    %3 = vector.load %arg3[%c0_3, %c0_4] : memref<1x1280xf32, #tpu.memory_space<vmem>>, vector<1x1280xf32>
    %4 = vector.broadcast %3 : vector<1x1280xf32> to vector<8x1280xf32>
    %5 = arith.mulf %2, %4 : vector<8x1280xf32>
    %c0_5 = arith.constant 0 : index
    %c0_6 = arith.constant 0 : index
    %6 = vector.load %arg4[%c0_5, %c0_6] : memref<1x1280xf32, #tpu.memory_space<vmem>>, vector<1x1280xf32>
    %7 = vector.broadcast %6 : vector<1x1280xf32> to vector<8x1280xf32>
    %8 = arith.addf %5, %7 : vector<8x1280xf32>
    %cst_7 = arith.constant 0.000000e+00 : f32
    %9 = vector.broadcast %cst_7 : f32 to vector<8x1280xf32>
    %10 = arith.maximumf %8, %9 : vector<8x1280xf32>
    %c0_8 = arith.constant 0 : index
    %c0_9 = arith.constant 0 : index
    %11 = vector.load %arg5[%c0_8, %c0_9] : memref<1280x256xf32, #tpu.memory_space<vmem>>, vector<1280x256xf32>
    %cst_10 = arith.constant dense<0.000000e+00> : vector<8x256xf32>
    %12 = tpu.matmul %10, %11, %cst_10 {dimension_numbers = #tpu.dot_dimension_numbers<[1], [0], [0], [1], [0, 0, 1, 1], [], []>} : vector<8x1280xf32>, vector<1280x256xf32>, vector<8x256xf32> -> vector<8x256xf32>
    %c0_11 = arith.constant 0 : index
    %c0_12 = arith.constant 0 : index
    %13 = vector.load %arg6[%c0_11, %c0_12] : memref<1x256xf32, #tpu.memory_space<vmem>>, vector<1x256xf32>
    %14 = vector.broadcast %13 : vector<1x256xf32> to vector<8x256xf32>
    %15 = arith.mulf %12, %14 : vector<8x256xf32>
    %c0_13 = arith.constant 0 : index
    %c0_14 = arith.constant 0 : index
    %16 = vector.load %arg7[%c0_13, %c0_14] : memref<1x256xf32, #tpu.memory_space<vmem>>, vector<1x256xf32>
    %17 = vector.broadcast %16 : vector<1x256xf32> to vector<8x256xf32>
    %18 = arith.addf %15, %17 : vector<8x256xf32>
    %cst_15 = arith.constant 0.000000e+00 : f32
    %19 = vector.broadcast %cst_15 : f32 to vector<8x256xf32>
    %20 = arith.maximumf %18, %19 : vector<8x256xf32>
    %c0_16 = arith.constant 0 : index
    %c0_17 = arith.constant 0 : index
    %21 = vector.load %arg8[%c0_16, %c0_17] : memref<256x512xf32, #tpu.memory_space<vmem>>, vector<256x512xf32>
    %cst_18 = arith.constant dense<0.000000e+00> : vector<8x512xf32>
    %22 = tpu.matmul %20, %21, %cst_18 {dimension_numbers = #tpu.dot_dimension_numbers<[1], [0], [0], [1], [0, 0, 1, 1], [], []>} : vector<8x256xf32>, vector<256x512xf32>, vector<8x512xf32> -> vector<8x512xf32>
    %c0_19 = arith.constant 0 : index
    %c0_20 = arith.constant 0 : index
    %23 = vector.load %arg9[%c0_19, %c0_20] : memref<1x512xf32, #tpu.memory_space<vmem>>, vector<1x512xf32>
    %24 = vector.broadcast %23 : vector<1x512xf32> to vector<8x512xf32>
    %25 = arith.addf %22, %24 : vector<8x512xf32>
    %cst_21 = arith.constant 0.000000e+00 : f32
    %26 = vector.broadcast %cst_21 : f32 to vector<8x512xf32>
    %27 = arith.maximumf %25, %26 : vector<8x512xf32>
    %c0_22 = arith.constant 0 : index
    %c0_23 = arith.constant 0 : index
    %28 = vector.load %arg10[%c0_22, %c0_23] : memref<512x128xf32, #tpu.memory_space<vmem>>, vector<512x128xf32>
    %cst_24 = arith.constant dense<0.000000e+00> : vector<8x128xf32>
    %29 = tpu.matmul %27, %28, %cst_24 {dimension_numbers = #tpu.dot_dimension_numbers<[1], [0], [0], [1], [0, 0, 1, 1], [], []>} : vector<8x512xf32>, vector<512x128xf32>, vector<8x128xf32> -> vector<8x128xf32>
    %c0_25 = arith.constant 0 : index
    %c0_26 = arith.constant 0 : index
    %30 = vector.load %arg11[%c0_25, %c0_26] : memref<1x128xf32, #tpu.memory_space<vmem>>, vector<1x128xf32>
    %31 = vector.broadcast %30 : vector<1x128xf32> to vector<8x128xf32>
    %32 = arith.addf %29, %31 : vector<8x128xf32>
    %cst_27 = arith.constant dense<0xFF800000> : vector<8xf32>
    %33 = vector.multi_reduction <maximumf>, %32, %cst_27 [1] : vector<8x128xf32> to vector<8xf32>
    %34 = vector.shape_cast %33 : vector<8xf32> to vector<8x1xf32>
    %35 = vector.broadcast %34 : vector<8x1xf32> to vector<8x128xf32>
    %36 = arith.subf %32, %35 : vector<8x128xf32>
    %37 = math.exp %36 : vector<8x128xf32>
    %cst_28 = arith.constant dense<0.000000e+00> : vector<8xf32>
    %38 = vector.multi_reduction <add>, %37, %cst_28 [1] : vector<8x128xf32> to vector<8xf32>
    %39 = vector.shape_cast %38 : vector<8xf32> to vector<8x1xf32>
    %40 = vector.broadcast %39 : vector<8x1xf32> to vector<8x128xf32>
    %41 = arith.divf %37, %40 : vector<8x128xf32>
    %c0_29 = arith.constant 0 : index
    %c0_30 = arith.constant 0 : index
    %42 = vector.load %arg12[%c0_29, %c0_30] : memref<8x128xf32, #tpu.memory_space<vmem>>, vector<8x128xf32>
    tpu.vector_store %arg12[%c0_29, %c0_30], %41 {strides = array<i32>} : memref<8x128xf32, #tpu.memory_space<vmem>>, vector<8x128xf32>,
    return
  }
  func.func @transform_0(%arg0: i32) -> (i32, i32) {
    %c0_i32 = arith.constant 0 : i32
    %c0_i32_0 = arith.constant 0 : i32
    return %arg0, %c0_i32 : i32, i32
  }
  func.func @transform_1(%arg0: i32) -> (i32, i32) {
    %c0_i32 = arith.constant 0 : i32
    %c0_i32_0 = arith.constant 0 : i32
    %c0_i32_1 = arith.constant 0 : i32
    return %c0_i32, %c0_i32_0 : i32, i32
  }
  func.func @transform_2(%arg0: i32) -> (i32, i32) {
    %c0_i32 = arith.constant 0 : i32
    %c0_i32_0 = arith.constant 0 : i32
    %c0_i32_1 = arith.constant 0 : i32
    return %c0_i32, %c0_i32_0 : i32, i32
  }
  func.func @transform_3(%arg0: i32) -> (i32, i32) {
    %c0_i32 = arith.constant 0 : i32
    %c0_i32_0 = arith.constant 0 : i32
    %c0_i32_1 = arith.constant 0 : i32
    return %c0_i32, %c0_i32_0 : i32, i32
  }
  func.func @transform_4(%arg0: i32) -> (i32, i32) {
    %c0_i32 = arith.constant 0 : i32
    %c0_i32_0 = arith.constant 0 : i32
    %c0_i32_1 = arith.constant 0 : i32
    return %c0_i32, %c0_i32_0 : i32, i32
  }
  func.func @transform_5(%arg0: i32) -> (i32, i32) {
    %c0_i32 = arith.constant 0 : i32
    %c0_i32_0 = arith.constant 0 : i32
    %c0_i32_1 = arith.constant 0 : i32
    return %c0_i32, %c0_i32_0 : i32, i32
  }
  func.func @transform_6(%arg0: i32) -> (i32, i32) {
    %c0_i32 = arith.constant 0 : i32
    %c0_i32_0 = arith.constant 0 : i32
    %c0_i32_1 = arith.constant 0 : i32
    return %c0_i32, %c0_i32_0 : i32, i32
  }
  func.func @transform_7(%arg0: i32) -> (i32, i32) {
    %c0_i32 = arith.constant 0 : i32
    %c0_i32_0 = arith.constant 0 : i32
    %c0_i32_1 = arith.constant 0 : i32
    return %c0_i32, %c0_i32_0 : i32, i32
  }
  func.func @transform_8(%arg0: i32) -> (i32, i32) {
    %c0_i32 = arith.constant 0 : i32
    %c0_i32_0 = arith.constant 0 : i32
    %c0_i32_1 = arith.constant 0 : i32
    return %c0_i32, %c0_i32_0 : i32, i32
  }
  func.func @transform_9(%arg0: i32) -> (i32, i32) {
    %c0_i32 = arith.constant 0 : i32
    %c0_i32_0 = arith.constant 0 : i32
    %c0_i32_1 = arith.constant 0 : i32
    return %c0_i32, %c0_i32_0 : i32, i32
  }
  func.func @transform_10(%arg0: i32) -> (i32, i32) {
    %c0_i32 = arith.constant 0 : i32
    %c0_i32_0 = arith.constant 0 : i32
    %c0_i32_1 = arith.constant 0 : i32
    return %c0_i32, %c0_i32_0 : i32, i32
  }
  func.func @transform_11(%arg0: i32) -> (i32, i32) {
    %c0_i32 = arith.constant 0 : i32
    %c0_i32_0 = arith.constant 0 : i32
    return %arg0, %c0_i32 : i32, i32
  }
}

</mosaic_0001>

<llo_original>
// kernel: convnet_forward.1
$region0: #{convnet_forward.1}
  #allocation0 [shape = 'u32[]', space=smem, size = 0x4, offset = 0x4, fixed_abs, tag = 'smem constant byte address 0x4 - core index']
  #allocation1 [shape = 'u32[72,128]{1,0:T(1,128)}', space=vmem, size = 0x9000, scoped, tag = 'internal scratch']
  %s0 = inlined_call_operand.vmem [shape: f32[8,72], index: 0, kind: input, shape index: {}]
  %s1 = inlined_call_operand.hbm [shape: f32[72,1280], index: 1, kind: input, shape index: {}]
  %s2 = inlined_call_operand.hbm [shape: f32[1,1280], index: 2, kind: input, shape index: {}]
  %s3 = inlined_call_operand.hbm [shape: f32[1,1280], index: 3, kind: input, shape index: {}]
  %s4 = inlined_call_operand.hbm [shape: f32[1280,256], index: 4, kind: input, shape index: {}]
  %s5 = inlined_call_operand.hbm [shape: f32[1,256], index: 5, kind: input, shape index: {}]
  %s6 = inlined_call_operand.hbm [shape: f32[1,256], index: 6, kind: input, shape index: {}]
  %s7 = inlined_call_operand.hbm [shape: f32[256,512], index: 7, kind: input, shape index: {}]
  %s8 = inlined_call_operand.hbm [shape: f32[1,512], index: 8, kind: input, shape index: {}]
  %s9 = inlined_call_operand.hbm [shape: f32[512,128], index: 9, kind: input, shape index: {}]
  %s10 = inlined_call_operand.hbm [shape: f32[1,128], index: 10, kind: input, shape index: {}]
  %s11 = inlined_call_operand.vmem [shape: f32[8,128], index: 11, kind: output, shape index: {}]
  %s12 = sld [smem:[#allocation0]]
  $region94: #{convnet_forward.1} parent=0
    _
  %s14 = ssub.s32 1, %s12
  %s15 = scalar_select 0, %s14, %s12
  $region1: #{convnet_forward.1} parent=0
    #allocation2 [shape = 'u8[368640]{0}', space=vmem, size = 0x5a000, scoped, tag = 'input window, operand 1, single buffered']
    #allocation3 [shape = 's32[1]{0}', space=sflag, size = 0x4, scoped, tag = 'scoped memory for convnet_forward.1']
    #allocation4 [shape = 'u8[5120]{0}', space=vmem, size = 0x1400, scoped, tag = 'input window, operand 2, single buffered']
    #allocation5 [shape = 's32[1]{0}', space=sflag, size = 0x4, scoped, tag = 'scoped memory for convnet_forward.1']
    #allocation6 [shape = 'u8[5120]{0}', space=vmem, size = 0x1400, scoped, tag = 'input window, operand 3, single buffered']
    #allocation7 [shape = 'u8[1310720]{0}', space=vmem, size = 0x140000, scoped, tag = 'input window, operand 4, single buffered']
    #allocation8 [shape = 's32[1]{0}', space=sflag, size = 0x4, scoped, tag = 'scoped memory for convnet_forward.1']
    #allocation9 [shape = 'u8[1024]{0}', space=vmem, size = 0x400, scoped, tag = 'input window, operand 5, single buffered']
    #allocation10 [shape = 'u8[1024]{0}', space=vmem, size = 0x400, scoped, tag = 'input window, operand 6, single buffered']
    #allocation11 [shape = 's32[1]{0}', space=sflag, size = 0x4, scoped, tag = 'scoped memory for convnet_forward.1']
    #allocation12 [shape = 'u8[524288]{0}', space=vmem, size = 0x80000, scoped, tag = 'input window, operand 7, single buffered']
    #allocation13 [shape = 'u8[2048]{0}', space=vmem, size = 0x800, scoped, tag = 'input window, operand 8, single buffered']
    #allocation14 [shape = 's32[1]{0}', space=sflag, size = 0x4, scoped, tag = 'scoped memory for convnet_forward.1']
    #allocation15 [shape = 'u8[262144]{0}', space=vmem, size = 0x40000, scoped, tag = 'input window, operand 9, single buffered']
    #allocation16 [shape = 'u8[512]{0}', space=vmem, size = 0x400, scoped, tag = 'input window, operand 10, single buffered']
    #allocation17 [shape = 's32[1]{0}', space=sflag, size = 0x4, scoped, tag = 'scoped memory for convnet_forward.1']
    %16 = vsyncpa [#allocation3], 0
    %17 = vsyncpa [#allocation5], 0
    %18 = vsyncpa [#allocation8], 0
    %19 = vsyncpa [#allocation11], 0
    %20 = vsyncpa [#allocation14], 0
    %21 = vsyncpa [#allocation17], 0
    // Predicated region
    $region2: #{convnet_forward.1} parent=1 // pred_check
      _
    $region3: #{convnet_forward.1} parent=1 // pred_check_branch
      %23 = sbr.rel (0) target = $region5
    $region4: #{convnet_forward.1} parent=1 // pred_region
      _
    $region5: #{convnet_forward.1} parent=1 // pred_fallthru
      _
    // Predicated region
    $region6: #{convnet_forward.1} parent=1 // pred_check
      _
    $region7: #{convnet_forward.1} parent=1 // pred_check_branch
      %25 = sbr.rel (0) target = $region9
    $region8: #{convnet_forward.1} parent=1 // pred_region
      %27 = vsyncadd [#allocation3], 0
      %s28 = sshll.u32 %s1, 4
      %s29 = int_to_ptr.hbm [resolvable:$true] %s28
      %s30 = sshll.u32 [#allocation2], 4
      %s31 = int_to_ptr.vmem [resolvable:$true] %s30
      %36 = dma.hbm_to_vmem [thread:$0]  %s29, 11520, %s31, [#allocation3], 1280, 1280, 80
    $region9: #{convnet_forward.1} parent=1 // pred_fallthru
      _
    // Predicated region
    $region10: #{convnet_forward.1} parent=1 // pred_check
      _
    $region11: #{convnet_forward.1} parent=1 // pred_check_branch
      %38 = sbr.rel (0) target = $region13
    $region12: #{convnet_forward.1} parent=1 // pred_region
      %40 = vsyncadd [#allocation5], 0
      %s42 = sshll.u32 %s2, 4
      %s43 = int_to_ptr.hbm [resolvable:$true] %s42
      %s44 = sshll.u32 [#allocation4], 4
      %s45 = int_to_ptr.vmem [resolvable:$true] %s44
      %47 = dma.hbm_to_vmem [thread:$0]  %s43, 160, %s45, [#allocation5]
    $region13: #{convnet_forward.1} parent=1 // pred_fallthru
      _
    // Predicated region
    $region14: #{convnet_forward.1} parent=1 // pred_check
      _
    $region15: #{convnet_forward.1} parent=1 // pred_check_branch
      %49 = sbr.rel (0) target = $region17
    $region16: #{convnet_forward.1} parent=1 // pred_region
      %51 = vsyncadd [#allocation5], 0
      %s53 = sshll.u32 %s3, 4
      %s54 = int_to_ptr.hbm [resolvable:$true] %s53
      %s55 = sshll.u32 [#allocation6], 4
      %s56 = int_to_ptr.vmem [resolvable:$true] %s55
      %58 = dma.hbm_to_vmem [thread:$0]  %s54, 160, %s56, [#allocation5]
    $region17: #{convnet_forward.1} parent=1 // pred_fallthru
      _
    // Predicated region
    $region18: #{convnet_forward.1} parent=1 // pred_check
      _
    $region19: #{convnet_forward.1} parent=1 // pred_check_branch
      %60 = sbr.rel (0) target = $region21
    $region20: #{convnet_forward.1} parent=1 // pred_region
      %62 = vsyncadd [#allocation8], 0
      %s63 = sshll.u32 %s4, 4
      %s64 = int_to_ptr.hbm [resolvable:$true] %s63
      %s65 = sshll.u32 [#allocation7], 4
      %s66 = int_to_ptr.vmem [resolvable:$true] %s65
      %71 = dma.hbm_to_vmem [thread:$0]  %s64, 40960, %s66, [#allocation8], 256, 256, 16
    $region21: #{convnet_forward.1} parent=1 // pred_fallthru
      _
    // Predicated region
    $region22: #{convnet_forward.1} parent=1 // pred_check
      _
    $region23: #{convnet_forward.1} parent=1 // pred_check_branch
      %73 = sbr.rel (0) target = $region25
    $region24: #{convnet_forward.1} parent=1 // pred_region
      %75 = vsyncadd [#allocation8], 0
      %s77 = sshll.u32 %s5, 4
      %s78 = int_to_ptr.hbm [resolvable:$true] %s77
      %s79 = sshll.u32 [#allocation9], 4
      %s80 = int_to_ptr.vmem [resolvable:$true] %s79
      %82 = dma.hbm_to_vmem [thread:$0]  %s78, 32, %s80, [#allocation8]
    $region25: #{convnet_forward.1} parent=1 // pred_fallthru
      _
    // Predicated region
    $region26: #{convnet_forward.1} parent=1 // pred_check
      _
    $region27: #{convnet_forward.1} parent=1 // pred_check_branch
      %84 = sbr.rel (0) target = $region29
    $region28: #{convnet_forward.1} parent=1 // pred_region
      %86 = vsyncadd [#allocation11], 0
      %s88 = sshll.u32 %s6, 4
      %s89 = int_to_ptr.hbm [resolvable:$true] %s88
      %s90 = sshll.u32 [#allocation10], 4
      %s91 = int_to_ptr.vmem [resolvable:$true] %s90
      %93 = dma.hbm_to_vmem [thread:$0]  %s89, 32, %s91, [#allocation11]
    $region29: #{convnet_forward.1} parent=1 // pred_fallthru
      _
    // Predicated region
    $region30: #{convnet_forward.1} parent=1 // pred_check
      _
    $region31: #{convnet_forward.1} parent=1 // pred_check_branch
      %95 = sbr.rel (0) target = $region33
    $region32: #{convnet_forward.1} parent=1 // pred_region
      %97 = vsyncadd [#allocation11], 0
      %s98 = sshll.u32 %s7, 4
      %s99 = int_to_ptr.hbm [resolvable:$true] %s98
      %s100 = sshll.u32 [#allocation12], 4
      %s101 = int_to_ptr.vmem [resolvable:$true] %s100
      %106 = dma.hbm_to_vmem [thread:$0]  %s99, 16384, %s101, [#allocation11], 512, 512, 32
    $region33: #{convnet_forward.1} parent=1 // pred_fallthru
      _
    // Predicated region
    $region34: #{convnet_forward.1} parent=1 // pred_check
      _
    $region35: #{convnet_forward.1} parent=1 // pred_check_branch
      %108 = sbr.rel (0) target = $region37
    $region36: #{convnet_forward.1} parent=1 // pred_region
      %110 = vsyncadd [#allocation14], 0
      %s112 = sshll.u32 %s8, 4
      %s113 = int_to_ptr.hbm [resolvable:$true] %s112
      %s114 = sshll.u32 [#allocation13], 4
      %s115 = int_to_ptr.vmem [resolvable:$true] %s114
      %117 = dma.hbm_to_vmem [thread:$0]  %s113, 64, %s115, [#allocation14]
    $region37: #{convnet_forward.1} parent=1 // pred_fallthru
      _
    // Predicated region
    $region38: #{convnet_forward.1} parent=1 // pred_check
      _
    $region39: #{convnet_forward.1} parent=1 // pred_check_branch
      %119 = sbr.rel (0) target = $region41
    $region40: #{convnet_forward.1} parent=1 // pred_region
      %121 = vsyncadd [#allocation14], 0
      %s122 = sshll.u32 %s9, 4
      %s123 = int_to_ptr.hbm [resolvable:$true] %s122
      %s124 = sshll.u32 [#allocation15], 4
      %s125 = int_to_ptr.vmem [resolvable:$true] %s124
      %130 = dma.hbm_to_vmem [thread:$0]  %s123, 8192, %s125, [#allocation14], 128, 128, 8
    $region41: #{convnet_forward.1} parent=1 // pred_fallthru
      _
    // Predicated region
    $region42: #{convnet_forward.1} parent=1 // pred_check
      _
    $region43: #{convnet_forward.1} parent=1 // pred_check_branch
      %132 = sbr.rel (0) target = $region45
    $region44: #{convnet_forward.1} parent=1 // pred_region
      %134 = vsyncadd [#allocation17], 0
      %s136 = sshll.u32 %s10, 4
      %s137 = int_to_ptr.hbm [resolvable:$true] %s136
      %s138 = sshll.u32 [#allocation16], 4
      %s139 = int_to_ptr.vmem [resolvable:$true] %s138
      %141 = dma.hbm_to_vmem [thread:$0]  %s137, 16, %s139, [#allocation17]
    $region45: #{convnet_forward.1} parent=1 // pred_fallthru
      _
    // Predicated region
    $region46: #{convnet_forward.1} parent=1 // pred_check
      _
    $region47: #{convnet_forward.1} parent=1 // pred_check_branch
      %143 = sbr.rel (0) target = $region49
    $region48: #{convnet_forward.1} parent=1 // pred_region
      %145 = dma.done [#allocation3], 11520
    $region49: #{convnet_forward.1} parent=1 // pred_fallthru
      _
    // Predicated region
    $region50: #{convnet_forward.1} parent=1 // pred_check
      _
    $region51: #{convnet_forward.1} parent=1 // pred_check_branch
      %147 = sbr.rel (0) target = $region53
    $region52: #{convnet_forward.1} parent=1 // pred_region
      %149 = dma.done [#allocation5], 160
    $region53: #{convnet_forward.1} parent=1 // pred_fallthru
      _
    // Predicated region
    $region54: #{convnet_forward.1} parent=1 // pred_check
      _
    $region55: #{convnet_forward.1} parent=1 // pred_check_branch
      %151 = sbr.rel (0) target = $region57
    $region56: #{convnet_forward.1} parent=1 // pred_region
      %153 = dma.done [#allocation5], 160
    $region57: #{convnet_forward.1} parent=1 // pred_fallthru
      _
    // Predicated region
    $region58: #{convnet_forward.1} parent=1 // pred_check
      _
    $region59: #{convnet_forward.1} parent=1 // pred_check_branch
      %155 = sbr.rel (0) target = $region61
    $region60: #{convnet_forward.1} parent=1 // pred_region
      %157 = dma.done [#allocation8], 40960
    $region61: #{convnet_forward.1} parent=1 // pred_fallthru
      _
    // Predicated region
    $region62: #{convnet_forward.1} parent=1 // pred_check
      _
    $region63: #{convnet_forward.1} parent=1 // pred_check_branch
      %159 = sbr.rel (0) target = $region65
    $region64: #{convnet_forward.1} parent=1 // pred_region
      %161 = dma.done [#allocation8], 32
    $region65: #{convnet_forward.1} parent=1 // pred_fallthru
      _
    // Predicated region
    $region66: #{convnet_forward.1} parent=1 // pred_check
      _
    $region67: #{convnet_forward.1} parent=1 // pred_check_branch
      %163 = sbr.rel (0) target = $region69
    $region68: #{convnet_forward.1} parent=1 // pred_region
      %165 = dma.done [#allocation11], 32
    $region69: #{convnet_forward.1} parent=1 // pred_fallthru
      _
    // Predicated region
    $region70: #{convnet_forward.1} parent=1 // pred_check
      _
    $region71: #{convnet_forward.1} parent=1 // pred_check_branch
      %167 = sbr.rel (0) target = $region73
    $region72: #{convnet_forward.1} parent=1 // pred_region
      %169 = dma.done [#allocation11], 16384
    $region73: #{convnet_forward.1} parent=1 // pred_fallthru
      _
    // Predicated region
    $region74: #{convnet_forward.1} parent=1 // pred_check
      _
    $region75: #{convnet_forward.1} parent=1 // pred_check_branch
      %171 = sbr.rel (0) target = $region77
    $region76: #{convnet_forward.1} parent=1 // pred_region
      %173 = dma.done [#allocation14], 64
    $region77: #{convnet_forward.1} parent=1 // pred_fallthru
      _
    // Predicated region
    $region78: #{convnet_forward.1} parent=1 // pred_check
      _
    $region79: #{convnet_forward.1} parent=1 // pred_check_branch
      %175 = sbr.rel (0) target = $region81
    $region80: #{convnet_forward.1} parent=1 // pred_region
      %177 = dma.done [#allocation14], 8192
    $region81: #{convnet_forward.1} parent=1 // pred_fallthru
      _
    // Predicated region
    $region82: #{convnet_forward.1} parent=1 // pred_check
      _
    $region83: #{convnet_forward.1} parent=1 // pred_check_branch
      %179 = sbr.rel (0) target = $region85
    $region84: #{convnet_forward.1} parent=1 // pred_region
      %181 = dma.done [#allocation17], 16
    $region85: #{convnet_forward.1} parent=1 // pred_fallthru
      _
    %v182 = vld [vmem:[%s0] sm:$0xff]
    %v183 = vld [vmem:[#allocation2] sm:$0xff]
    %v184 = vld [vmem:[#allocation2 + $0x8] sm:$0xff]
    %v185 = vld [vmem:[#allocation2 + $0x10] sm:$0xff]
    %v186 = vld [vmem:[#allocation2 + $0x18] sm:$0xff]
    %v187 = vld [vmem:[#allocation2 + $0x20] sm:$0xff]
    %v188 = vld [vmem:[#allocation2 + $0x28] sm:$0xff]
    %v189 = vld [vmem:[#allocation2 + $0x30] sm:$0xff]
    %v190 = vld [vmem:[#allocation2 + $0x38] sm:$0xff]
    %v191 = vld [vmem:[#allocation2 + $0x40] sm:$0xff]
    %v192 = vld [vmem:[#allocation2 + $0x48] sm:$0xff]
    %v193 = vld [vmem:[#allocation2 + $0x50] sm:$0xff]
    %v194 = vld [vmem:[#allocation2 + $0x58] sm:$0xff]
    %v195 = vld [vmem:[#allocation2 + $0x60] sm:$0xff]
    %v196 = vld [vmem:[#allocation2 + $0x68] sm:$0xff]
    %v197 = vld [vmem:[#allocation2 + $0x70] sm:$0xff]
    %v198 = vld [vmem:[#allocation2 + $0x78] sm:$0xff]
    %v199 = vld [vmem:[#allocation2 + $0x80] sm:$0xff]
    %v200 = vld [vmem:[#allocation2 + $0x88] sm:$0xff]
    %v201 = vld [vmem:[#allocation2 + $0x90] sm:$0xff]
    %v202 = vld [vmem:[#allocation2 + $0x98] sm:$0xff]
    %v203 = vld [vmem:[#allocation2 + $0xa0] sm:$0xff]
    %v204 = vld [vmem:[#allocation2 + $0xa8] sm:$0xff]
    %v205 = vld [vmem:[#allocation2 + $0xb0] sm:$0xff]
    %v206 = vld [vmem:[#allocation2 + $0xb8] sm:$0xff]
    %v207 = vld [vmem:[#allocation2 + $0xc0] sm:$0xff]
    %v208 = vld [vmem:[#allocation2 + $0xc8] sm:$0xff]
    %v209 = vld [vmem:[#allocation2 + $0xd0] sm:$0xff]
    %v210 = vld [vmem:[#allocation2 + $0xd8] sm:$0xff]
    %v211 = vld [vmem:[#allocation2 + $0xe0] sm:$0xff]
    %v212 = vld [vmem:[#allocation2 + $0xe8] sm:$0xff]
    %v213 = vld [vmem:[#allocation2 + $0xf0] sm:$0xff]
    %v214 = vld [vmem:[#allocation2 + $0xf8] sm:$0xff]
    %v215 = vld [vmem:[#allocation2 + $0x100] sm:$0xff]
    %v216 = vld [vmem:[#allocation2 + $0x108] sm:$0xff]
    %v217 = vld [vmem:[#allocation2 + $0x110] sm:$0xff]
    %v218 = vld [vmem:[#allocation2 + $0x118] sm:$0xff]
    %v219 = vld [vmem:[#allocation2 + $0x120] sm:$0xff]
    %v220 = vld [vmem:[#allocation2 + $0x128] sm:$0xff]
    %v221 = vld [vmem:[#allocation2 + $0x130] sm:$0xff]
    %v222 = vld [vmem:[#allocation2 + $0x138] sm:$0xff]
    %v223 = vld [vmem:[#allocation2 + $0x140] sm:$0xff]
    %v224 = vld [vmem:[#allocation2 + $0x148] sm:$0xff]
    %v225 = vld [vmem:[#allocation2 + $0x150] sm:$0xff]
    %v226 = vld [vmem:[#allocation2 + $0x158] sm:$0xff]
    %v227 = vld [vmem:[#allocation2 + $0x160] sm:$0xff]
    %v228 = vld [vmem:[#allocation2 + $0x168] sm:$0xff]
    %v229 = vld [vmem:[#allocation2 + $0x170] sm:$0xff]
    %v230 = vld [vmem:[#allocation2 + $0x178] sm:$0xff]
    %v231 = vld [vmem:[#allocation2 + $0x180] sm:$0xff]
    %v232 = vld [vmem:[#allocation2 + $0x188] sm:$0xff]
    %v233 = vld [vmem:[#allocation2 + $0x190] sm:$0xff]
    %v234 = vld [vmem:[#allocation2 + $0x198] sm:$0xff]
    %v235 = vld [vmem:[#allocation2 + $0x1a0] sm:$0xff]
    %v236 = vld [vmem:[#allocation2 + $0x1a8] sm:$0xff]
    %v237 = vld [vmem:[#allocation2 + $0x1b0] sm:$0xff]
    %v238 = vld [vmem:[#allocation2 + $0x1b8] sm:$0xff]
    %v239 = vld [vmem:[#allocation2 + $0x1c0] sm:$0xff]
    %v240 = vld [vmem:[#allocation2 + $0x1c8] sm:$0xff]
    %v241 = vld [vmem:[#allocation2 + $0x1d0] sm:$0xff]
    %v242 = vld [vmem:[#allocation2 + $0x1d8] sm:$0xff]
    %v243 = vld [vmem:[#allocation2 + $0x1e0] sm:$0xff]
    %v244 = vld [vmem:[#allocation2 + $0x1e8] sm:$0xff]
    %v245 = vld [vmem:[#allocation2 + $0x1f0] sm:$0xff]
    %v246 = vld [vmem:[#allocation2 + $0x1f8] sm:$0xff]
    %v247 = vld [vmem:[#allocation2 + $0x200] sm:$0xff]
    %v248 = vld [vmem:[#allocation2 + $0x208] sm:$0xff]
    %v249 = vld [vmem:[#allocation2 + $0x210] sm:$0xff]
    %v250 = vld [vmem:[#allocation2 + $0x218] sm:$0xff]
    %v251 = vld [vmem:[#allocation2 + $0x220] sm:$0xff]
    %v252 = vld [vmem:[#allocation2 + $0x228] sm:$0xff]
    %v253 = vld [vmem:[#allocation2 + $0x230] sm:$0xff]
    %v254 = vld [vmem:[#allocation2 + $0x238] sm:$0xff]
    %v255 = vld [vmem:[#allocation2 + $0x240] sm:$0xff]
    %v256 = vld [vmem:[#allocation2 + $0x248] sm:$0xff]
    %v257 = vld [vmem:[#allocation2 + $0x250] sm:$0xff]
    %v258 = vld [vmem:[#allocation2 + $0x258] sm:$0xff]
    %v259 = vld [vmem:[#allocation2 + $0x260] sm:$0xff]
    %v260 = vld [vmem:[#allocation2 + $0x268] sm:$0xff]
    %v261 = vld [vmem:[#allocation2 + $0x270] sm:$0xff]
    %v262 = vld [vmem:[#allocation2 + $0x278] sm:$0xff]
    %v263 = vld [vmem:[#allocation2 + $0x280] sm:$0xff]
    %v264 = vld [vmem:[#allocation2 + $0x288] sm:$0xff]
    %v265 = vld [vmem:[#allocation2 + $0x290] sm:$0xff]
    %v266 = vld [vmem:[#allocation2 + $0x298] sm:$0xff]
    %v267 = vld [vmem:[#allocation2 + $0x2a0] sm:$0xff]
    %v268 = vld [vmem:[#allocation2 + $0x2a8] sm:$0xff]
    %v269 = vld [vmem:[#allocation2 + $0x2b0] sm:$0xff]
    %v270 = vld [vmem:[#allocation2 + $0x2b8] sm:$0xff]
    %v271 = vld [vmem:[#allocation2 + $0x2c0] sm:$0xff]
    %v272 = vld [vmem:[#allocation2 + $0x2c8] sm:$0xff]
    %vm273 = vcmask 588800
    %v275 = vsel %vm273, %v182, 0
    %277 = vmatpush.msra.mxu0 0.0
    %278 = vmatpush.msra.mxu0 0.0
    %279 = vmatpush.msra.mxu0 0.0
    %280 = vmatpush.msra.mxu0 0.0
    %281 = vmatpush.msra.mxu0 0.0
    %282 = vmatpush.msra.mxu0 0.0
    %283 = vmatpush.msra.mxu0 0.0
    %284 = vmatpush.msra.mxu0 %v263
    %285 = vmatpush.msra.mxu0 %v253
    %286 = vmatpush.msra.mxu0 %v243
    %287 = vmatpush.msra.mxu0 %v233
    %288 = vmatpush.msra.mxu0 %v223
    %289 = vmatpush.msra.mxu0 %v213
    %290 = vmatpush.msra.mxu0 %v203
    %291 = vmatpush.msra.mxu0 %v193
    %292 = vmatpush.msra.mxu0 %v183
    %293 = vmatmul.f32.gmra.mxu0 %v275
    %v294 = vpop.f32.mrf.mxu0
    %v295 = vadd.f32 0.0, %v294
    %296 = vdwg.mxu0
    %297 = vmatpush.msra.mxu0 0.0
    %298 = vmatpush.msra.mxu0 0.0
    %299 = vmatpush.msra.mxu0 0.0
    %300 = vmatpush.msra.mxu0 0.0
    %301 = vmatpush.msra.mxu0 0.0
    %302 = vmatpush.msra.mxu0 0.0
    %303 = vmatpush.msra.mxu0 0.0
    %304 = vmatpush.msra.mxu0 %v264
    %305 = vmatpush.msra.mxu0 %v254
    %306 = vmatpush.msra.mxu0 %v244
    %307 = vmatpush.msra.mxu0 %v234
    %308 = vmatpush.msra.mxu0 %v224
    %309 = vmatpush.msra.mxu0 %v214
    %310 = vmatpush.msra.mxu0 %v204
    %311 = vmatpush.msra.mxu0 %v194
    %312 = vmatpush.msra.mxu0 %v184
    %313 = vmatmul.f32.gmra.mxu0 %v275
    %v314 = vpop.f32.mrf.mxu0
    %v315 = vadd.f32 0.0, %v314
    %316 = vdwg.mxu0
    %317 = vmatpush.msra.mxu0 0.0
    %318 = vmatpush.msra.mxu0 0.0
    %319 = vmatpush.msra.mxu0 0.0
    %320 = vmatpush.msra.mxu0 0.0
    %321 = vmatpush.msra.mxu0 0.0
    %322 = vmatpush.msra.mxu0 0.0
    %323 = vmatpush.msra.mxu0 0.0
    %324 = vmatpush.msra.mxu0 %v265
    %325 = vmatpush.msra.mxu0 %v255
    %326 = vmatpush.msra.mxu0 %v245
    %327 = vmatpush.msra.mxu0 %v235
    %328 = vmatpush.msra.mxu0 %v225
    %329 = vmatpush.msra.mxu0 %v215
    %330 = vmatpush.msra.mxu0 %v205
    %331 = vmatpush.msra.mxu0 %v195
    %332 = vmatpush.msra.mxu0 %v185
    %333 = vmatmul.f32.gmra.mxu0 %v275
    %v334 = vpop.f32.mrf.mxu0
    %v335 = vadd.f32 0.0, %v334
    %336 = vdwg.mxu0
    %337 = vmatpush.msra.mxu0 0.0
    %338 = vmatpush.msra.mxu0 0.0
    %339 = vmatpush.msra.mxu0 0.0
    %340 = vmatpush.msra.mxu0 0.0
    %341 = vmatpush.msra.mxu0 0.0
    %342 = vmatpush.msra.mxu0 0.0
    %343 = vmatpush.msra.mxu0 0.0
    %344 = vmatpush.msra.mxu0 %v266
    %345 = vmatpush.msra.mxu0 %v256
    %346 = vmatpush.msra.mxu0 %v246
    %347 = vmatpush.msra.mxu0 %v236
    %348 = vmatpush.msra.mxu0 %v226
    %349 = vmatpush.msra.mxu0 %v216
    %350 = vmatpush.msra.mxu0 %v206
    %351 = vmatpush.msra.mxu0 %v196
    %352 = vmatpush.msra.mxu0 %v186
    %353 = vmatmul.f32.gmra.mxu0 %v275
    %v354 = vpop.f32.mrf.mxu0
    %v355 = vadd.f32 0.0, %v354
    %356 = vdwg.mxu0
    %357 = vmatpush.msra.mxu0 0.0
    %358 = vmatpush.msra.mxu0 0.0
    %359 = vmatpush.msra.mxu0 0.0
    %360 = vmatpush.msra.mxu0 0.0
    %361 = vmatpush.msra.mxu0 0.0
    %362 = vmatpush.msra.mxu0 0.0
    %363 = vmatpush.msra.mxu0 0.0
    %364 = vmatpush.msra.mxu0 %v267
    %365 = vmatpush.msra.mxu0 %v257
    %366 = vmatpush.msra.mxu0 %v247
    %367 = vmatpush.msra.mxu0 %v237
    %368 = vmatpush.msra.mxu0 %v227
    %369 = vmatpush.msra.mxu0 %v217
    %370 = vmatpush.msra.mxu0 %v207
    %371 = vmatpush.msra.mxu0 %v197
    %372 = vmatpush.msra.mxu0 %v187
    %373 = vmatmul.f32.gmra.mxu0 %v275
    %v374 = vpop.f32.mrf.mxu0
    %v375 = vadd.f32 0.0, %v374
    %376 = vdwg.mxu0
    %377 = vmatpush.msra.mxu0 0.0
    %378 = vmatpush.msra.mxu0 0.0
    %379 = vmatpush.msra.mxu0 0.0
    %380 = vmatpush.msra.mxu0 0.0
    %381 = vmatpush.msra.mxu0 0.0
    %382 = vmatpush.msra.mxu0 0.0
    %383 = vmatpush.msra.mxu0 0.0
    %384 = vmatpush.msra.mxu0 %v268
    %385 = vmatpush.msra.mxu0 %v258
    %386 = vmatpush.msra.mxu0 %v248
    %387 = vmatpush.msra.mxu0 %v238
    %388 = vmatpush.msra.mxu0 %v228
    %389 = vmatpush.msra.mxu0 %v218
    %390 = vmatpush.msra.mxu0 %v208
    %391 = vmatpush.msra.mxu0 %v198
    %392 = vmatpush.msra.mxu0 %v188
    %393 = vmatmul.f32.gmra.mxu0 %v275
    %v394 = vpop.f32.mrf.mxu0
    %v395 = vadd.f32 0.0, %v394
    %396 = vdwg.mxu0
    %397 = vmatpush.msra.mxu0 0.0
    %398 = vmatpush.msra.mxu0 0.0
    %399 = vmatpush.msra.mxu0 0.0
    %400 = vmatpush.msra.mxu0 0.0
    %401 = vmatpush.msra.mxu0 0.0
    %402 = vmatpush.msra.mxu0 0.0
    %403 = vmatpush.msra.mxu0 0.0
    %404 = vmatpush.msra.mxu0 %v269
    %405 = vmatpush.msra.mxu0 %v259
    %406 = vmatpush.msra.mxu0 %v249
    %407 = vmatpush.msra.mxu0 %v239
    %408 = vmatpush.msra.mxu0 %v229
    %409 = vmatpush.msra.mxu0 %v219
    %410 = vmatpush.msra.mxu0 %v209
    %411 = vmatpush.msra.mxu0 %v199
    %412 = vmatpush.msra.mxu0 %v189
    %413 = vmatmul.f32.gmra.mxu0 %v275
    %v414 = vpop.f32.mrf.mxu0
    %v415 = vadd.f32 0.0, %v414
    %416 = vdwg.mxu0
    %417 = vmatpush.msra.mxu0 0.0
    %418 = vmatpush.msra.mxu0 0.0
    %419 = vmatpush.msra.mxu0 0.0
    %420 = vmatpush.msra.mxu0 0.0
    %421 = vmatpush.msra.mxu0 0.0
    %422 = vmatpush.msra.mxu0 0.0
    %423 = vmatpush.msra.mxu0 0.0
    %424 = vmatpush.msra.mxu0 %v270
    %425 = vmatpush.msra.mxu0 %v260
    %426 = vmatpush.msra.mxu0 %v250
    %427 = vmatpush.msra.mxu0 %v240
    %428 = vmatpush.msra.mxu0 %v230
    %429 = vmatpush.msra.mxu0 %v220
    %430 = vmatpush.msra.mxu0 %v210
    %431 = vmatpush.msra.mxu0 %v200
    %432 = vmatpush.msra.mxu0 %v190
    %433 = vmatmul.f32.gmra.mxu0 %v275
    %v434 = vpop.f32.mrf.mxu0
    %v435 = vadd.f32 0.0, %v434
    %436 = vdwg.mxu0
    %437 = vmatpush.msra.mxu0 0.0
    %438 = vmatpush.msra.mxu0 0.0
    %439 = vmatpush.msra.mxu0 0.0
    %440 = vmatpush.msra.mxu0 0.0
    %441 = vmatpush.msra.mxu0 0.0
    %442 = vmatpush.msra.mxu0 0.0
    %443 = vmatpush.msra.mxu0 0.0
    %444 = vmatpush.msra.mxu0 %v271
    %445 = vmatpush.msra.mxu0 %v261
    %446 = vmatpush.msra.mxu0 %v251
    %447 = vmatpush.msra.mxu0 %v241
    %448 = vmatpush.msra.mxu0 %v231
    %449 = vmatpush.msra.mxu0 %v221
    %450 = vmatpush.msra.mxu0 %v211
    %451 = vmatpush.msra.mxu0 %v201
    %452 = vmatpush.msra.mxu0 %v191
    %453 = vmatmul.f32.gmra.mxu0 %v275
    %v454 = vpop.f32.mrf.mxu0
    %v455 = vadd.f32 0.0, %v454
    %456 = vdwg.mxu0
    %457 = vmatpush.msra.mxu0 0.0
    %458 = vmatpush.msra.mxu0 0.0
    %459 = vmatpush.msra.mxu0 0.0
    %460 = vmatpush.msra.mxu0 0.0
    %461 = vmatpush.msra.mxu0 0.0
    %462 = vmatpush.msra.mxu0 0.0
    %463 = vmatpush.msra.mxu0 0.0
    %464 = vmatpush.msra.mxu0 %v272
    %465 = vmatpush.msra.mxu0 %v262
    %466 = vmatpush.msra.mxu0 %v252
    %467 = vmatpush.msra.mxu0 %v242
    %468 = vmatpush.msra.mxu0 %v232
    %469 = vmatpush.msra.mxu0 %v222
    %470 = vmatpush.msra.mxu0 %v212
    %471 = vmatpush.msra.mxu0 %v202
    %472 = vmatpush.msra.mxu0 %v192
    %473 = vmatmul.f32.gmra.mxu0 %v275
    %v474 = vpop.f32.mrf.mxu0
    %v475 = vadd.f32 0.0, %v474
    %476 = vdwg.mxu0
    %v477 = vld [vmem:[#allocation4] sm:$0xff]
    %v478 = vld [vmem:[#allocation4 + $0x8] sm:$0x3]
    %v481 = vperm.slane %v477, 0
    %v482 = vperm.slane %v477, 1
    %v483 = vperm.slane %v477, 2
    %v484 = vperm.slane %v477, 3
    %v485 = vperm.slane %v477, 4
    %v486 = vperm.slane %v477, 5
    %v487 = vperm.slane %v477, 6
    %v488 = vperm.slane %v477, 7
    %v489 = vperm.slane %v478, 0
    %v490 = vperm.slane %v478, 1
    %v501 = vmul.f32 %v295, %v481
    %v502 = vmul.f32 %v315, %v482
    %v503 = vmul.f32 %v335, %v483
    %v504 = vmul.f32 %v355, %v484
    %v505 = vmul.f32 %v375, %v485
    %v506 = vmul.f32 %v395, %v486
    %v507 = vmul.f32 %v415, %v487
    %v508 = vmul.f32 %v435, %v488
    %v509 = vmul.f32 %v455, %v489
    %v510 = vmul.f32 %v475, %v490
    %v511 = vld [vmem:[#allocation6] sm:$0xff]
    %v512 = vld [vmem:[#allocation6 + $0x8] sm:$0x3]
    %v515 = vperm.slane %v511, 0
    %v516 = vperm.slane %v511, 1
    %v517 = vperm.slane %v511, 2
    %v518 = vperm.slane %v511, 3
    %v519 = vperm.slane %v511, 4
    %v520 = vperm.slane %v511, 5
    %v521 = vperm.slane %v511, 6
    %v522 = vperm.slane %v511, 7
    %v523 = vperm.slane %v512, 0
    %v524 = vperm.slane %v512, 1
    %v535 = vadd.f32 %v501, %v515
    %v536 = vadd.f32 %v502, %v516
    %v537 = vadd.f32 %v503, %v517
    %v538 = vadd.f32 %v504, %v518
    %v539 = vadd.f32 %v505, %v519
    %v540 = vadd.f32 %v506, %v520
    %v541 = vadd.f32 %v507, %v521
    %v542 = vadd.f32 %v508, %v522
    %v543 = vadd.f32 %v509, %v523
    %v544 = vadd.f32 %v510, %v524
    %v545 = vmax.f32 %v535, 0.0
    %v546 = vmax.f32 %v536, 0.0
    %v547 = vmax.f32 %v537, 0.0
    %v548 = vmax.f32 %v538, 0.0
    %v549 = vmax.f32 %v539, 0.0
    %v550 = vmax.f32 %v540, 0.0
    %v551 = vmax.f32 %v541, 0.0
    %v552 = vmax.f32 %v542, 0.0
    %v553 = vmax.f32 %v543, 0.0
    %v554 = vmax.f32 %v544, 0.0
    %v555 = vld [vmem:[#allocation7] sm:$0xff]
    %v556 = vld [vmem:[#allocation7 + $0x8] sm:$0xff]
    %v557 = vld [vmem:[#allocation7 + $0x10] sm:$0xff]
    %v558 = vld [vmem:[#allocation7 + $0x18] sm:$0xff]
    %v559 = vld [vmem:[#allocation7 + $0x20] sm:$0xff]
    %v560 = vld [vmem:[#allocation7 + $0x28] sm:$0xff]
    %v561 = vld [vmem:[#allocation7 + $0x30] sm:$0xff]
    %v562 = vld [vmem:[#allocation7 + $0x38] sm:$0xff]
    %v563 = vld [vmem:[#allocation7 + $0x40] sm:$0xff]
    %v564 = vld [vmem:[#allocation7 + $0x48] sm:$0xff]
    %v565 = vld [vmem:[#allocation7 + $0x50] sm:$0xff]
    %v566 = vld [vmem:[#allocation7 + $0x58] sm:$0xff]
    %v567 = vld [vmem:[#allocation7 + $0x60] sm:$0xff]
    %v568 = vld [vmem:[#allocation7 + $0x68] sm:$0xff]
    %v569 = vld [vmem:[#allocation7 + $0x70] sm:$0xff]
    %v570 = vld [vmem:[#allocation7 + $0x78] sm:$0xff]
    %v571 = vld [vmem:[#allocation7 + $0x80] sm:$0xff]
    %v572 = vld [vmem:[#allocation7 + $0x88] sm:$0xff]
    %v573 = vld [vmem:[#allocation7 + $0x90] sm:$0xff]
    %v574 = vld [vmem:[#allocation7 + $0x98] sm:$0xff]
    %v575 = vld [vmem:[#allocation7 + $0xa0] sm:$0xff]
    %v576 = vld [vmem:[#allocation7 + $0xa8] sm:$0xff]
    %v577 = vld [vmem:[#allocation7 + $0xb0] sm:$0xff]
    %v578 = vld [vmem:[#allocation7 + $0xb8] sm:$0xff]
    %v579 = vld [vmem:[#allocation7 + $0xc0] sm:$0xff]
    %v580 = vld [vmem:[#allocation7 + $0xc8] sm:$0xff]
    %v581 = vld [vmem:[#allocation7 + $0xd0] sm:$0xff]
    %v582 = vld [vmem:[#allocation7 + $0xd8] sm:$0xff]
    %v583 = vld [vmem:[#allocation7 + $0xe0] sm:$0xff]
    %v584 = vld [vmem:[#allocation7 + $0xe8] sm:$0xff]
    %v585 = vld [vmem:[#allocation7 + $0xf0] sm:$0xff]
    %v586 = vld [vmem:[#allocation7 + $0xf8] sm:$0xff]
    %v587 = vld [vmem:[#allocation7 + $0x100] sm:$0xff]
    %v588 = vld [vmem:[#allocation7 + $0x108] sm:$0xff]
    %v589 = vld [vmem:[#allocation7 + $0x110] sm:$0xff]
    %v590 = vld [vmem:[#allocation7 + $0x118] sm:$0xff]
    %v591 = vld [vmem:[#allocation7 + $0x120] sm:$0xff]
    %v592 = vld [vmem:[#allocation7 + $0x128] sm:$0xff]
    %v593 = vld [vmem:[#allocation7 + $0x130] sm:$0xff]
    %v594 = vld [vmem:[#allocation7 + $0x138] sm:$0xff]
    %v595 = vld [vmem:[#allocation7 + $0x140] sm:$0xff]
    %v596 = vld [vmem:[#allocation7 + $0x148] sm:$0xff]
    %v597 = vld [vmem:[#allocation7 + $0x150] sm:$0xff]
    %v598 = vld [vmem:[#allocation7 + $0x158] sm:$0xff]
    %v599 = vld [vmem:[#allocation7 + $0x160] sm:$0xff]
    %v600 = vld [vmem:[#allocation7 + $0x168] sm:$0xff]
    %v601 = vld [vmem:[#allocation7 + $0x170] sm:$0xff]
    %v602 = vld [vmem:[#allocation7 + $0x178] sm:$0xff]
    %v603 = vld [vmem:[#allocation7 + $0x180] sm:$0xff]
    %v604 = vld [vmem:[#allocation7 + $0x188] sm:$0xff]
    %v605 = vld [vmem:[#allocation7 + $0x190] sm:$0xff]
    %v606 = vld [vmem:[#allocation7 + $0x198] sm:$0xff]
    %v607 = vld [vmem:[#allocation7 + $0x1a0] sm:$0xff]
    %v608 = vld [vmem:[#allocation7 + $0x1a8] sm:$0xff]
    %v609 = vld [vmem:[#allocation7 + $0x1b0] sm:$0xff]
    %v610 = vld [vmem:[#allocation7 + $0x1b8] sm:$0xff]
    %v611 = vld [vmem:[#allocation7 + $0x1c0] sm:$0xff]
    %v612 = vld [vmem:[#allocation7 + $0x1c8] sm:$0xff]
    %v613 = vld [vmem:[#allocation7 + $0x1d0] sm:$0xff]
    %v614 = vld [vmem:[#allocation7 + $0x1d8] sm:$0xff]
    %v615 = vld [vmem:[#allocation7 + $0x1e0] sm:$0xff]
    %v616 = vld [vmem:[#allocation7 + $0x1e8] sm:$0xff]
    %v617 = vld [vmem:[#allocation7 + $0x1f0] sm:$0xff]
    %v618 = vld [vmem:[#allocation7 + $0x1f8] sm:$0xff]
    %v619 = vld [vmem:[#allocation7 + $0x200] sm:$0xff]
    %v620 = vld [vmem:[#allocation7 + $0x208] sm:$0xff]
    %v621 = vld [vmem:[#allocation7 + $0x210] sm:$0xff]
    %v622 = vld [vmem:[#allocation7 + $0x218] sm:$0xff]
    %v623 = vld [vmem:[#allocation7 + $0x220] sm:$0xff]
    %v624 = vld [vmem:[#allocation7 + $0x228] sm:$0xff]
    %v625 = vld [vmem:[#allocation7 + $0x230] sm:$0xff]
    %v626 = vld [vmem:[#allocation7 + $0x238] sm:$0xff]
    %v627 = vld [vmem:[#allocation7 + $0x240] sm:$0xff]
    %v628 = vld [vmem:[#allocation7 + $0x248] sm:$0xff]
    %v629 = vld [vmem:[#allocation7 + $0x250] sm:$0xff]
    %v630 = vld [vmem:[#allocation7 + $0x258] sm:$0xff]
    %v631 = vld [vmem:[#allocation7 + $0x260] sm:$0xff]
    %v632 = vld [vmem:[#allocation7 + $0x268] sm:$0xff]
    %v633 = vld [vmem:[#allocation7 + $0x270] sm:$0xff]
    %v634 = vld [vmem:[#allocation7 + $0x278] sm:$0xff]
    %v635 = vld [vmem:[#allocation7 + $0x280] sm:$0xff]
    %v636 = vld [vmem:[#allocation7 + $0x288] sm:$0xff]
    %v637 = vld [vmem:[#allocation7 + $0x290] sm:$0xff]
    %v638 = vld [vmem:[#allocation7 + $0x298] sm:$0xff]
    %v639 = vld [vmem:[#allocation7 + $0x2a0] sm:$0xff]
    %v640 = vld [vmem:[#allocation7 + $0x2a8] sm:$0xff]
    %v641 = vld [vmem:[#allocation7 + $0x2b0] sm:$0xff]
    %v642 = vld [vmem:[#allocation7 + $0x2b8] sm:$0xff]
    %v643 = vld [vmem:[#allocation7 + $0x2c0] sm:$0xff]
    %v644 = vld [vmem:[#allocation7 + $0x2c8] sm:$0xff]
    %v645 = vld [vmem:[#allocation7 + $0x2d0] sm:$0xff]
    %v646 = vld [vmem:[#allocation7 + $0x2d8] sm:$0xff]
    %v647 = vld [vmem:[#allocation7 + $0x2e0] sm:$0xff]
    %v648 = vld [vmem:[#allocation7 + $0x2e8] sm:$0xff]
    %v649 = vld [vmem:[#allocation7 + $0x2f0] sm:$0xff]
    %v650 = vld [vmem:[#allocation7 + $0x2f8] sm:$0xff]
    %v651 = vld [vmem:[#allocation7 + $0x300] sm:$0xff]
    %v652 = vld [vmem:[#allocation7 + $0x308] sm:$0xff]
    %v653 = vld [vmem:[#allocation7 + $0x310] sm:$0xff]
    %v654 = vld [vmem:[#allocation7 + $0x318] sm:$0xff]
    %v655 = vld [vmem:[#allocation7 + $0x320] sm:$0xff]
    %v656 = vld [vmem:[#allocation7 + $0x328] sm:$0xff]
    %v657 = vld [vmem:[#allocation7 + $0x330] sm:$0xff]
    %v658 = vld [vmem:[#allocation7 + $0x338] sm:$0xff]
    %v659 = vld [vmem:[#allocation7 + $0x340] sm:$0xff]
    %v660 = vld [vmem:[#allocation7 + $0x348] sm:$0xff]
    %v661 = vld [vmem:[#allocation7 + $0x350] sm:$0xff]
    %v662 = vld [vmem:[#allocation7 + $0x358] sm:$0xff]
    %v663 = vld [vmem:[#allocation7 + $0x360] sm:$0xff]
    %v664 = vld [vmem:[#allocation7 + $0x368] sm:$0xff]
    %v665 = vld [vmem:[#allocation7 + $0x370] sm:$0xff]
    %v666 = vld [vmem:[#allocation7 + $0x378] sm:$0xff]
    %v667 = vld [vmem:[#allocation7 + $0x380] sm:$0xff]
    %v668 = vld [vmem:[#allocation7 + $0x388] sm:$0xff]
    %v669 = vld [vmem:[#allocation7 + $0x390] sm:$0xff]
    %v670 = vld [vmem:[#allocation7 + $0x398] sm:$0xff]
    %v671 = vld [vmem:[#allocation7 + $0x3a0] sm:$0xff]
    %v672 = vld [vmem:[#allocation7 + $0x3a8] sm:$0xff]
    %v673 = vld [vmem:[#allocation7 + $0x3b0] sm:$0xff]
    %v674 = vld [vmem:[#allocation7 + $0x3b8] sm:$0xff]
    %v675 = vld [vmem:[#allocation7 + $0x3c0] sm:$0xff]
    %v676 = vld [vmem:[#allocation7 + $0x3c8] sm:$0xff]
    %v677 = vld [vmem:[#allocation7 + $0x3d0] sm:$0xff]
    %v678 = vld [vmem:[#allocation7 + $0x3d8] sm:$0xff]
    %v679 = vld [vmem:[#allocation7 + $0x3e0] sm:$0xff]
    %v680 = vld [vmem:[#allocation7 + $0x3e8] sm:$0xff]
    %v681 = vld [vmem:[#allocation7 + $0x3f0] sm:$0xff]
    %v682 = vld [vmem:[#allocation7 + $0x3f8] sm:$0xff]
    %v683 = vld [vmem:[#allocation7 + $0x400] sm:$0xff]
    %v684 = vld [vmem:[#allocation7 + $0x408] sm:$0xff]
    %v685 = vld [vmem:[#allocation7 + $0x410] sm:$0xff]
    %v686 = vld [vmem:[#allocation7 + $0x418] sm:$0xff]
    %v687 = vld [vmem:[#allocation7 + $0x420] sm:$0xff]
    %v688 = vld [vmem:[#allocation7 + $0x428] sm:$0xff]
    %v689 = vld [vmem:[#allocation7 + $0x430] sm:$0xff]
    %v690 = vld [vmem:[#allocation7 + $0x438] sm:$0xff]
    %v691 = vld [vmem:[#allocation7 + $0x440] sm:$0xff]
    %v692 = vld [vmem:[#allocation7 + $0x448] sm:$0xff]
    %v693 = vld [vmem:[#allocation7 + $0x450] sm:$0xff]
    %v694 = vld [vmem:[#allocation7 + $0x458] sm:$0xff]
    %v695 = vld [vmem:[#allocation7 + $0x460] sm:$0xff]
    %v696 = vld [vmem:[#allocation7 + $0x468] sm:$0xff]
    %v697 = vld [vmem:[#allocation7 + $0x470] sm:$0xff]
    %v698 = vld [vmem:[#allocation7 + $0x478] sm:$0xff]
    %v699 = vld [vmem:[#allocation7 + $0x480] sm:$0xff]
    %v700 = vld [vmem:[#allocation7 + $0x488] sm:$0xff]
    %v701 = vld [vmem:[#allocation7 + $0x490] sm:$0xff]
    %v702 = vld [vmem:[#allocation7 + $0x498] sm:$0xff]
    %v703 = vld [vmem:[#allocation7 + $0x4a0] sm:$0xff]
    %v704 = vld [vmem:[#allocation7 + $0x4a8] sm:$0xff]
    %v705 = vld [vmem:[#allocation7 + $0x4b0] sm:$0xff]
    %v706 = vld [vmem:[#allocation7 + $0x4b8] sm:$0xff]
    %v707 = vld [vmem:[#allocation7 + $0x4c0] sm:$0xff]
    %v708 = vld [vmem:[#allocation7 + $0x4c8] sm:$0xff]
    %v709 = vld [vmem:[#allocation7 + $0x4d0] sm:$0xff]
    %v710 = vld [vmem:[#allocation7 + $0x4d8] sm:$0xff]
    %v711 = vld [vmem:[#allocation7 + $0x4e0] sm:$0xff]
    %v712 = vld [vmem:[#allocation7 + $0x4e8] sm:$0xff]
    %v713 = vld [vmem:[#allocation7 + $0x4f0] sm:$0xff]
    %v714 = vld [vmem:[#allocation7 + $0x4f8] sm:$0xff]
    %v715 = vld [vmem:[#allocation7 + $0x500] sm:$0xff]
    %v716 = vld [vmem:[#allocation7 + $0x508] sm:$0xff]
    %v717 = vld [vmem:[#allocation7 + $0x510] sm:$0xff]
    %v718 = vld [vmem:[#allocation7 + $0x518] sm:$0xff]
    %v719 = vld [vmem:[#allocation7 + $0x520] sm:$0xff]
    %v720 = vld [vmem:[#allocation7 + $0x528] sm:$0xff]
    %v721 = vld [vmem:[#allocation7 + $0x530] sm:$0xff]
    %v722 = vld [vmem:[#allocation7 + $0x538] sm:$0xff]
    %v723 = vld [vmem:[#allocation7 + $0x540] sm:$0xff]
    %v724 = vld [vmem:[#allocation7 + $0x548] sm:$0xff]
    %v725 = vld [vmem:[#allocation7 + $0x550] sm:$0xff]
    %v726 = vld [vmem:[#allocation7 + $0x558] sm:$0xff]
    %v727 = vld [vmem:[#allocation7 + $0x560] sm:$0xff]
    %v728 = vld [vmem:[#allocation7 + $0x568] sm:$0xff]
    %v729 = vld [vmem:[#allocation7 + $0x570] sm:$0xff]
    %v730 = vld [vmem:[#allocation7 + $0x578] sm:$0xff]
    %v731 = vld [vmem:[#allocation7 + $0x580] sm:$0xff]
    %v732 = vld [vmem:[#allocation7 + $0x588] sm:$0xff]
    %v733 = vld [vmem:[#allocation7 + $0x590] sm:$0xff]
    %v734 = vld [vmem:[#allocation7 + $0x598] sm:$0xff]
    %v735 = vld [vmem:[#allocation7 + $0x5a0] sm:$0xff]
    %v736 = vld [vmem:[#allocation7 + $0x5a8] sm:$0xff]
    %v737 = vld [vmem:[#allocation7 + $0x5b0] sm:$0xff]
    %v738 = vld [vmem:[#allocation7 + $0x5b8] sm:$0xff]
    %v739 = vld [vmem:[#allocation7 + $0x5c0] sm:$0xff]
    %v740 = vld [vmem:[#allocation7 + $0x5c8] sm:$0xff]
    %v741 = vld [vmem:[#allocation7 + $0x5d0] sm:$0xff]
    %v742 = vld [vmem:[#allocation7 + $0x5d8] sm:$0xff]
    %v743 = vld [vmem:[#allocation7 + $0x5e0] sm:$0xff]
    %v744 = vld [vmem:[#allocation7 + $0x5e8] sm:$0xff]
    %v745 = vld [vmem:[#allocation7 + $0x5f0] sm:$0xff]
    %v746 = vld [vmem:[#allocation7 + $0x5f8] sm:$0xff]
    %v747 = vld [vmem:[#allocation7 + $0x600] sm:$0xff]
    %v748 = vld [vmem:[#allocation7 + $0x608] sm:$0xff]
    %v749 = vld [vmem:[#allocation7 + $0x610] sm:$0xff]
    %v750 = vld [vmem:[#allocation7 + $0x618] sm:$0xff]
    %v751 = vld [vmem:[#allocation7 + $0x620] sm:$0xff]
    %v752 = vld [vmem:[#allocation7 + $0x628] sm:$0xff]
    %v753 = vld [vmem:[#allocation7 + $0x630] sm:$0xff]
    %v754 = vld [vmem:[#allocation7 + $0x638] sm:$0xff]
    %v755 = vld [vmem:[#allocation7 + $0x640] sm:$0xff]
    %v756 = vld [vmem:[#allocation7 + $0x648] sm:$0xff]
    %v757 = vld [vmem:[#allocation7 + $0x650] sm:$0xff]
    %v758 = vld [vmem:[#allocation7 + $0x658] sm:$0xff]
    %v759 = vld [vmem:[#allocation7 + $0x660] sm:$0xff]
    %v760 = vld [vmem:[#allocation7 + $0x668] sm:$0xff]
    %v761 = vld [vmem:[#allocation7 + $0x670] sm:$0xff]
    %v762 = vld [vmem:[#allocation7 + $0x678] sm:$0xff]
    %v763 = vld [vmem:[#allocation7 + $0x680] sm:$0xff]
    %v764 = vld [vmem:[#allocation7 + $0x688] sm:$0xff]
    %v765 = vld [vmem:[#allocation7 + $0x690] sm:$0xff]
    %v766 = vld [vmem:[#allocation7 + $0x698] sm:$0xff]
    %v767 = vld [vmem:[#allocation7 + $0x6a0] sm:$0xff]
    %v768 = vld [vmem:[#allocation7 + $0x6a8] sm:$0xff]
    %v769 = vld [vmem:[#allocation7 + $0x6b0] sm:$0xff]
    %v770 = vld [vmem:[#allocation7 + $0x6b8] sm:$0xff]
    %v771 = vld [vmem:[#allocation7 + $0x6c0] sm:$0xff]
    %v772 = vld [vmem:[#allocation7 + $0x6c8] sm:$0xff]
    %v773 = vld [vmem:[#allocation7 + $0x6d0] sm:$0xff]
    %v774 = vld [vmem:[#allocation7 + $0x6d8] sm:$0xff]
    %v775 = vld [vmem:[#allocation7 + $0x6e0] sm:$0xff]
    %v776 = vld [vmem:[#allocation7 + $0x6e8] sm:$0xff]
    %v777 = vld [vmem:[#allocation7 + $0x6f0] sm:$0xff]
    %v778 = vld [vmem:[#allocation7 + $0x6f8] sm:$0xff]
    %v779 = vld [vmem:[#allocation7 + $0x700] sm:$0xff]
    %v780 = vld [vmem:[#allocation7 + $0x708] sm:$0xff]
    %v781 = vld [vmem:[#allocation7 + $0x710] sm:$0xff]
    %v782 = vld [vmem:[#allocation7 + $0x718] sm:$0xff]
    %v783 = vld [vmem:[#allocation7 + $0x720] sm:$0xff]
    %v784 = vld [vmem:[#allocation7 + $0x728] sm:$0xff]
    %v785 = vld [vmem:[#allocation7 + $0x730] sm:$0xff]
    %v786 = vld [vmem:[#allocation7 + $0x738] sm:$0xff]
    %v787 = vld [vmem:[#allocation7 + $0x740] sm:$0xff]
    %v788 = vld [vmem:[#allocation7 + $0x748] sm:$0xff]
    %v789 = vld [vmem:[#allocation7 + $0x750] sm:$0xff]
    %v790 = vld [vmem:[#allocation7 + $0x758] sm:$0xff]
    %v791 = vld [vmem:[#allocation7 + $0x760] sm:$0xff]
    %v792 = vld [vmem:[#allocation7 + $0x768] sm:$0xff]
    %v793 = vld [vmem:[#allocation7 + $0x770] sm:$0xff]
    %v794 = vld [vmem:[#allocation7 + $0x778] sm:$0xff]
    %v795 = vld [vmem:[#allocation7 + $0x780] sm:$0xff]
    %v796 = vld [vmem:[#allocation7 + $0x788] sm:$0xff]
    %v797 = vld [vmem:[#allocation7 + $0x790] sm:$0xff]
    %v798 = vld [vmem:[#allocation7 + $0x798] sm:$0xff]
    %v799 = vld [vmem:[#allocation7 + $0x7a0] sm:$0xff]
    %v800 = vld [vmem:[#allocation7 + $0x7a8] sm:$0xff]
    %v801 = vld [vmem:[#allocation7 + $0x7b0] sm:$0xff]
    %v802 = vld [vmem:[#allocation7 + $0x7b8] sm:$0xff]
    %v803 = vld [vmem:[#allocation7 + $0x7c0] sm:$0xff]
    %v804 = vld [vmem:[#allocation7 + $0x7c8] sm:$0xff]
    %v805 = vld [vmem:[#allocation7 + $0x7d0] sm:$0xff]
    %v806 = vld [vmem:[#allocation7 + $0x7d8] sm:$0xff]
    %v807 = vld [vmem:[#allocation7 + $0x7e0] sm:$0xff]
    %v808 = vld [vmem:[#allocation7 + $0x7e8] sm:$0xff]
    %v809 = vld [vmem:[#allocation7 + $0x7f0] sm:$0xff]
    %v810 = vld [vmem:[#allocation7 + $0x7f8] sm:$0xff]
    %v811 = vld [vmem:[#allocation7 + $0x800] sm:$0xff]
    %v812 = vld [vmem:[#allocation7 + $0x808] sm:$0xff]
    %v813 = vld [vmem:[#allocation7 + $0x810] sm:$0xff]
    %v814 = vld [vmem:[#allocation7 + $0x818] sm:$0xff]
    %v815 = vld [vmem:[#allocation7 + $0x820] sm:$0xff]
    %v816 = vld [vmem:[#allocation7 + $0x828] sm:$0xff]
    %v817 = vld [vmem:[#allocation7 + $0x830] sm:$0xff]
    %v818 = vld [vmem:[#allocation7 + $0x838] sm:$0xff]
    %v819 = vld [vmem:[#allocation7 + $0x840] sm:$0xff]
    %v820 = vld [vmem:[#allocation7 + $0x848] sm:$0xff]
    %v821 = vld [vmem:[#allocation7 + $0x850] sm:$0xff]
    %v822 = vld [vmem:[#allocation7 + $0x858] sm:$0xff]
    %v823 = vld [vmem:[#allocation7 + $0x860] sm:$0xff]
    %v824 = vld [vmem:[#allocation7 + $0x868] sm:$0xff]
    %v825 = vld [vmem:[#allocation7 + $0x870] sm:$0xff]
    %v826 = vld [vmem:[#allocation7 + $0x878] sm:$0xff]
    %v827 = vld [vmem:[#allocation7 + $0x880] sm:$0xff]
    %v828 = vld [vmem:[#allocation7 + $0x888] sm:$0xff]
    %v829 = vld [vmem:[#allocation7 + $0x890] sm:$0xff]
    %v830 = vld [vmem:[#allocation7 + $0x898] sm:$0xff]
    %v831 = vld [vmem:[#allocation7 + $0x8a0] sm:$0xff]
    %v832 = vld [vmem:[#allocation7 + $0x8a8] sm:$0xff]
    %v833 = vld [vmem:[#allocation7 + $0x8b0] sm:$0xff]
    %v834 = vld [vmem:[#allocation7 + $0x8b8] sm:$0xff]
    %v835 = vld [vmem:[#allocation7 + $0x8c0] sm:$0xff]
    %v836 = vld [vmem:[#allocation7 + $0x8c8] sm:$0xff]
    %v837 = vld [vmem:[#allocation7 + $0x8d0] sm:$0xff]
    %v838 = vld [vmem:[#allocation7 + $0x8d8] sm:$0xff]
    %v839 = vld [vmem:[#allocation7 + $0x8e0] sm:$0xff]
    %v840 = vld [vmem:[#allocation7 + $0x8e8] sm:$0xff]
    %v841 = vld [vmem:[#allocation7 + $0x8f0] sm:$0xff]
    %v842 = vld [vmem:[#allocation7 + $0x8f8] sm:$0xff]
    %v843 = vld [vmem:[#allocation7 + $0x900] sm:$0xff]
    %v844 = vld [vmem:[#allocation7 + $0x908] sm:$0xff]
    %v845 = vld [vmem:[#allocation7 + $0x910] sm:$0xff]
    %v846 = vld [vmem:[#allocation7 + $0x918] sm:$0xff]
    %v847 = vld [vmem:[#allocation7 + $0x920] sm:$0xff]
    %v848 = vld [vmem:[#allocation7 + $0x928] sm:$0xff]
    %v849 = vld [vmem:[#allocation7 + $0x930] sm:$0xff]
    %v850 = vld [vmem:[#allocation7 + $0x938] sm:$0xff]
    %v851 = vld [vmem:[#allocation7 + $0x940] sm:$0xff]
    %v852 = vld [vmem:[#allocation7 + $0x948] sm:$0xff]
    %v853 = vld [vmem:[#allocation7 + $0x950] sm:$0xff]
    %v854 = vld [vmem:[#allocation7 + $0x958] sm:$0xff]
    %v855 = vld [vmem:[#allocation7 + $0x960] sm:$0xff]
    %v856 = vld [vmem:[#allocation7 + $0x968] sm:$0xff]
    %v857 = vld [vmem:[#allocation7 + $0x970] sm:$0xff]
    %v858 = vld [vmem:[#allocation7 + $0x978] sm:$0xff]
    %v859 = vld [vmem:[#allocation7 + $0x980] sm:$0xff]
    %v860 = vld [vmem:[#allocation7 + $0x988] sm:$0xff]
    %v861 = vld [vmem:[#allocation7 + $0x990] sm:$0xff]
    %v862 = vld [vmem:[#allocation7 + $0x998] sm:$0xff]
    %v863 = vld [vmem:[#allocation7 + $0x9a0] sm:$0xff]
    %v864 = vld [vmem:[#allocation7 + $0x9a8] sm:$0xff]
    %v865 = vld [vmem:[#allocation7 + $0x9b0] sm:$0xff]
    %v866 = vld [vmem:[#allocation7 + $0x9b8] sm:$0xff]
    %v867 = vld [vmem:[#allocation7 + $0x9c0] sm:$0xff]
    %v868 = vld [vmem:[#allocation7 + $0x9c8] sm:$0xff]
    %v869 = vld [vmem:[#allocation7 + $0x9d0] sm:$0xff]
    %v870 = vld [vmem:[#allocation7 + $0x9d8] sm:$0xff]
    %v871 = vld [vmem:[#allocation7 + $0x9e0] sm:$0xff]
    %v872 = vld [vmem:[#allocation7 + $0x9e8] sm:$0xff]
    %v873 = vld [vmem:[#allocation7 + $0x9f0] sm:$0xff]
    %v874 = vld [vmem:[#allocation7 + $0x9f8] sm:$0xff]
    %875 = vmatpush.msra.mxu0 %v585
    %876 = vmatpush.msra.mxu0 %v583
    %877 = vmatpush.msra.mxu0 %v581
    %878 = vmatpush.msra.mxu0 %v579
    %879 = vmatpush.msra.mxu0 %v577
    %880 = vmatpush.msra.mxu0 %v575
    %881 = vmatpush.msra.mxu0 %v573
    %882 = vmatpush.msra.mxu0 %v571
    %883 = vmatpush.msra.mxu0 %v569
    %884 = vmatpush.msra.mxu0 %v567
    %885 = vmatpush.msra.mxu0 %v565
    %886 = vmatpush.msra.mxu0 %v563
    %887 = vmatpush.msra.mxu0 %v561
    %888 = vmatpush.msra.mxu0 %v559
    %889 = vmatpush.msra.mxu0 %v557
    %890 = vmatpush.msra.mxu0 %v555
    %891 = vmatmul.f32.gmra.mxu0 %v545
    %v892 = vpop.f32.mrf.mxu0
    %v893 = vadd.f32 0.0, %v892
    %894 = vdwg.mxu0
    %895 = vmatpush.msra.mxu0 %v617
    %896 = vmatpush.msra.mxu0 %v615
    %897 = vmatpush.msra.mxu0 %v613
    %898 = vmatpush.msra.mxu0 %v611
    %899 = vmatpush.msra.mxu0 %v609
    %900 = vmatpush.msra.mxu0 %v607
    %901 = vmatpush.msra.mxu0 %v605
    %902 = vmatpush.msra.mxu0 %v603
    %903 = vmatpush.msra.mxu0 %v601
    %904 = vmatpush.msra.mxu0 %v599
    %905 = vmatpush.msra.mxu0 %v597
    %906 = vmatpush.msra.mxu0 %v595
    %907 = vmatpush.msra.mxu0 %v593
    %908 = vmatpush.msra.mxu0 %v591
    %909 = vmatpush.msra.mxu0 %v589
    %910 = vmatpush.msra.mxu0 %v587
    %911 = vmatmul.f32.gmra.mxu0 %v546
    %v912 = vpop.f32.mrf.mxu0
    %v913 = vadd.f32 %v893, %v912
    %914 = vdwg.mxu0
    %915 = vmatpush.msra.mxu0 %v649
    %916 = vmatpush.msra.mxu0 %v647
    %917 = vmatpush.msra.mxu0 %v645
    %918 = vmatpush.msra.mxu0 %v643
    %919 = vmatpush.msra.mxu0 %v641
    %920 = vmatpush.msra.mxu0 %v639
    %921 = vmatpush.msra.mxu0 %v637
    %922 = vmatpush.msra.mxu0 %v635
    %923 = vmatpush.msra.mxu0 %v633
    %924 = vmatpush.msra.mxu0 %v631
    %925 = vmatpush.msra.mxu0 %v629
    %926 = vmatpush.msra.mxu0 %v627
    %927 = vmatpush.msra.mxu0 %v625
    %928 = vmatpush.msra.mxu0 %v623
    %929 = vmatpush.msra.mxu0 %v621
    %930 = vmatpush.msra.mxu0 %v619
    %931 = vmatmul.f32.gmra.mxu0 %v547
    %v932 = vpop.f32.mrf.mxu0
    %v933 = vadd.f32 %v913, %v932
    %934 = vdwg.mxu0
    %935 = vmatpush.msra.mxu0 %v681
    %936 = vmatpush.msra.mxu0 %v679
    %937 = vmatpush.msra.mxu0 %v677
    %938 = vmatpush.msra.mxu0 %v675
    %939 = vmatpush.msra.mxu0 %v673
    %940 = vmatpush.msra.mxu0 %v671
    %941 = vmatpush.msra.mxu0 %v669
    %942 = vmatpush.msra.mxu0 %v667
    %943 = vmatpush.msra.mxu0 %v665
    %944 = vmatpush.msra.mxu0 %v663
    %945 = vmatpush.msra.mxu0 %v661
    %946 = vmatpush.msra.mxu0 %v659
    %947 = vmatpush.msra.mxu0 %v657
    %948 = vmatpush.msra.mxu0 %v655
    %949 = vmatpush.msra.mxu0 %v653
    %950 = vmatpush.msra.mxu0 %v651
    %951 = vmatmul.f32.gmra.mxu0 %v548
    %v952 = vpop.f32.mrf.mxu0
    %v953 = vadd.f32 %v933, %v952
    %954 = vdwg.mxu0
    %955 = vmatpush.msra.mxu0 %v713
    %956 = vmatpush.msra.mxu0 %v711
    %957 = vmatpush.msra.mxu0 %v709
    %958 = vmatpush.msra.mxu0 %v707
    %959 = vmatpush.msra.mxu0 %v705
    %960 = vmatpush.msra.mxu0 %v703
    %961 = vmatpush.msra.mxu0 %v701
    %962 = vmatpush.msra.mxu0 %v699
    %963 = vmatpush.msra.mxu0 %v697
    %964 = vmatpush.msra.mxu0 %v695
    %965 = vmatpush.msra.mxu0 %v693
    %966 = vmatpush.msra.mxu0 %v691
    %967 = vmatpush.msra.mxu0 %v689
    %968 = vmatpush.msra.mxu0 %v687
    %969 = vmatpush.msra.mxu0 %v685
    %970 = vmatpush.msra.mxu0 %v683
    %971 = vmatmul.f32.gmra.mxu0 %v549
    %v972 = vpop.f32.mrf.mxu0
    %v973 = vadd.f32 %v953, %v972
    %974 = vdwg.mxu0
    %975 = vmatpush.msra.mxu0 %v745
    %976 = vmatpush.msra.mxu0 %v743
    %977 = vmatpush.msra.mxu0 %v741
    %978 = vmatpush.msra.mxu0 %v739
    %979 = vmatpush.msra.mxu0 %v737
    %980 = vmatpush.msra.mxu0 %v735
    %981 = vmatpush.msra.mxu0 %v733
    %982 = vmatpush.msra.mxu0 %v731
    %983 = vmatpush.msra.mxu0 %v729
    %984 = vmatpush.msra.mxu0 %v727
    %985 = vmatpush.msra.mxu0 %v725
    %986 = vmatpush.msra.mxu0 %v723
    %987 = vmatpush.msra.mxu0 %v721
    %988 = vmatpush.msra.mxu0 %v719
    %989 = vmatpush.msra.mxu0 %v717
    %990 = vmatpush.msra.mxu0 %v715
    %991 = vmatmul.f32.gmra.mxu0 %v550
    %v992 = vpop.f32.mrf.mxu0
    %v993 = vadd.f32 %v973, %v992
    %994 = vdwg.mxu0
    %995 = vmatpush.msra.mxu0 %v777
    %996 = vmatpush.msra.mxu0 %v775
    %997 = vmatpush.msra.mxu0 %v773
    %998 = vmatpush.msra.mxu0 %v771
    %999 = vmatpush.msra.mxu0 %v769
    %1000 = vmatpush.msra.mxu0 %v767
    %1001 = vmatpush.msra.mxu0 %v765
    %1002 = vmatpush.msra.mxu0 %v763
    %1003 = vmatpush.msra.mxu0 %v761
    %1004 = vmatpush.msra.mxu0 %v759
    %1005 = vmatpush.msra.mxu0 %v757
    %1006 = vmatpush.msra.mxu0 %v755
    %1007 = vmatpush.msra.mxu0 %v753
    %1008 = vmatpush.msra.mxu0 %v751
    %1009 = vmatpush.msra.mxu0 %v749
    %1010 = vmatpush.msra.mxu0 %v747
    %1011 = vmatmul.f32.gmra.mxu0 %v551
    %v1012 = vpop.f32.mrf.mxu0
    %v1013 = vadd.f32 %v993, %v1012
    %1014 = vdwg.mxu0
    %1015 = vmatpush.msra.mxu0 %v809
    %1016 = vmatpush.msra.mxu0 %v807
    %1017 = vmatpush.msra.mxu0 %v805
    %1018 = vmatpush.msra.mxu0 %v803
    %1019 = vmatpush.msra.mxu0 %v801
    %1020 = vmatpush.msra.mxu0 %v799
    %1021 = vmatpush.msra.mxu0 %v797
    %1022 = vmatpush.msra.mxu0 %v795
    %1023 = vmatpush.msra.mxu0 %v793
    %1024 = vmatpush.msra.mxu0 %v791
    %1025 = vmatpush.msra.mxu0 %v789
    %1026 = vmatpush.msra.mxu0 %v787
    %1027 = vmatpush.msra.mxu0 %v785
    %1028 = vmatpush.msra.mxu0 %v783
    %1029 = vmatpush.msra.mxu0 %v781
    %1030 = vmatpush.msra.mxu0 %v779
    %1031 = vmatmul.f32.gmra.mxu0 %v552
    %v1032 = vpop.f32.mrf.mxu0
    %v1033 = vadd.f32 %v1013, %v1032
    %1034 = vdwg.mxu0
    %1035 = vmatpush.msra.mxu0 %v841
    %1036 = vmatpush.msra.mxu0 %v839
    %1037 = vmatpush.msra.mxu0 %v837
    %1038 = vmatpush.msra.mxu0 %v835
    %1039 = vmatpush.msra.mxu0 %v833
    %1040 = vmatpush.msra.mxu0 %v831
    %1041 = vmatpush.msra.mxu0 %v829
    %1042 = vmatpush.msra.mxu0 %v827
    %1043 = vmatpush.msra.mxu0 %v825
    %1044 = vmatpush.msra.mxu0 %v823
    %1045 = vmatpush.msra.mxu0 %v821
    %1046 = vmatpush.msra.mxu0 %v819
    %1047 = vmatpush.msra.mxu0 %v817
    %1048 = vmatpush.msra.mxu0 %v815
    %1049 = vmatpush.msra.mxu0 %v813
    %1050 = vmatpush.msra.mxu0 %v811
    %1051 = vmatmul.f32.gmra.mxu0 %v553
    %v1052 = vpop.f32.mrf.mxu0
    %v1053 = vadd.f32 %v1033, %v1052
    %1054 = vdwg.mxu0
    %1055 = vmatpush.msra.mxu0 %v873
    %1056 = vmatpush.msra.mxu0 %v871
    %1057 = vmatpush.msra.mxu0 %v869
    %1058 = vmatpush.msra.mxu0 %v867
    %1059 = vmatpush.msra.mxu0 %v865
    %1060 = vmatpush.msra.mxu0 %v863
    %1061 = vmatpush.msra.mxu0 %v861
    %1062 = vmatpush.msra.mxu0 %v859
    %1063 = vmatpush.msra.mxu0 %v857
    %1064 = vmatpush.msra.mxu0 %v855
    %1065 = vmatpush.msra.mxu0 %v853
    %1066 = vmatpush.msra.mxu0 %v851
    %1067 = vmatpush.msra.mxu0 %v849
    %1068 = vmatpush.msra.mxu0 %v847
    %1069 = vmatpush.msra.mxu0 %v845
    %1070 = vmatpush.msra.mxu0 %v843
    %1071 = vmatmul.f32.gmra.mxu0 %v554
    %v1072 = vpop.f32.mrf.mxu0
    %v1073 = vadd.f32 %v1053, %v1072
    %1074 = vdwg.mxu0
    %1075 = vmatpush.msra.mxu0 %v586
    %1076 = vmatpush.msra.mxu0 %v584
    %1077 = vmatpush.msra.mxu0 %v582
    %1078 = vmatpush.msra.mxu0 %v580
    %1079 = vmatpush.msra.mxu0 %v578
    %1080 = vmatpush.msra.mxu0 %v576
    %1081 = vmatpush.msra.mxu0 %v574
    %1082 = vmatpush.msra.mxu0 %v572
    %1083 = vmatpush.msra.mxu0 %v570
    %1084 = vmatpush.msra.mxu0 %v568
    %1085 = vmatpush.msra.mxu0 %v566
    %1086 = vmatpush.msra.mxu0 %v564
    %1087 = vmatpush.msra.mxu0 %v562
    %1088 = vmatpush.msra.mxu0 %v560
    %1089 = vmatpush.msra.mxu0 %v558
    %1090 = vmatpush.msra.mxu0 %v556
    %1091 = vmatmul.f32.gmra.mxu0 %v545
    %v1092 = vpop.f32.mrf.mxu0
    %v1093 = vadd.f32 0.0, %v1092
    %1094 = vdwg.mxu0
    %1095 = vmatpush.msra.mxu0 %v618
    %1096 = vmatpush.msra.mxu0 %v616
    %1097 = vmatpush.msra.mxu0 %v614
    %1098 = vmatpush.msra.mxu0 %v612
    %1099 = vmatpush.msra.mxu0 %v610
    %1100 = vmatpush.msra.mxu0 %v608
    %1101 = vmatpush.msra.mxu0 %v606
    %1102 = vmatpush.msra.mxu0 %v604
    %1103 = vmatpush.msra.mxu0 %v602
    %1104 = vmatpush.msra.mxu0 %v600
    %1105 = vmatpush.msra.mxu0 %v598
    %1106 = vmatpush.msra.mxu0 %v596
    %1107 = vmatpush.msra.mxu0 %v594
    %1108 = vmatpush.msra.mxu0 %v592
    %1109 = vmatpush.msra.mxu0 %v590
    %1110 = vmatpush.msra.mxu0 %v588
    %1111 = vmatmul.f32.gmra.mxu0 %v546
    %v1112 = vpop.f32.mrf.mxu0
    %v1113 = vadd.f32 %v1093, %v1112
    %1114 = vdwg.mxu0
    %1115 = vmatpush.msra.mxu0 %v650
    %1116 = vmatpush.msra.mxu0 %v648
    %1117 = vmatpush.msra.mxu0 %v646
    %1118 = vmatpush.msra.mxu0 %v644
    %1119 = vmatpush.msra.mxu0 %v642
    %1120 = vmatpush.msra.mxu0 %v640
    %1121 = vmatpush.msra.mxu0 %v638
    %1122 = vmatpush.msra.mxu0 %v636
    %1123 = vmatpush.msra.mxu0 %v634
    %1124 = vmatpush.msra.mxu0 %v632
    %1125 = vmatpush.msra.mxu0 %v630
    %1126 = vmatpush.msra.mxu0 %v628
    %1127 = vmatpush.msra.mxu0 %v626
    %1128 = vmatpush.msra.mxu0 %v624
    %1129 = vmatpush.msra.mxu0 %v622
    %1130 = vmatpush.msra.mxu0 %v620
    %1131 = vmatmul.f32.gmra.mxu0 %v547
    %v1132 = vpop.f32.mrf.mxu0
    %v1133 = vadd.f32 %v1113, %v1132
    %1134 = vdwg.mxu0
    %1135 = vmatpush.msra.mxu0 %v682
    %1136 = vmatpush.msra.mxu0 %v680
    %1137 = vmatpush.msra.mxu0 %v678
    %1138 = vmatpush.msra.mxu0 %v676
    %1139 = vmatpush.msra.mxu0 %v674
    %1140 = vmatpush.msra.mxu0 %v672
    %1141 = vmatpush.msra.mxu0 %v670
    %1142 = vmatpush.msra.mxu0 %v668
    %1143 = vmatpush.msra.mxu0 %v666
    %1144 = vmatpush.msra.mxu0 %v664
    %1145 = vmatpush.msra.mxu0 %v662
    %1146 = vmatpush.msra.mxu0 %v660
    %1147 = vmatpush.msra.mxu0 %v658
    %1148 = vmatpush.msra.mxu0 %v656
    %1149 = vmatpush.msra.mxu0 %v654
    %1150 = vmatpush.msra.mxu0 %v652
    %1151 = vmatmul.f32.gmra.mxu0 %v548
    %v1152 = vpop.f32.mrf.mxu0
    %v1153 = vadd.f32 %v1133, %v1152
    %1154 = vdwg.mxu0
    %1155 = vmatpush.msra.mxu0 %v714
    %1156 = vmatpush.msra.mxu0 %v712
    %1157 = vmatpush.msra.mxu0 %v710
    %1158 = vmatpush.msra.mxu0 %v708
    %1159 = vmatpush.msra.mxu0 %v706
    %1160 = vmatpush.msra.mxu0 %v704
    %1161 = vmatpush.msra.mxu0 %v702
    %1162 = vmatpush.msra.mxu0 %v700
    %1163 = vmatpush.msra.mxu0 %v698
    %1164 = vmatpush.msra.mxu0 %v696
    %1165 = vmatpush.msra.mxu0 %v694
    %1166 = vmatpush.msra.mxu0 %v692
    %1167 = vmatpush.msra.mxu0 %v690
    %1168 = vmatpush.msra.mxu0 %v688
    %1169 = vmatpush.msra.mxu0 %v686
    %1170 = vmatpush.msra.mxu0 %v684
    %1171 = vmatmul.f32.gmra.mxu0 %v549
    %v1172 = vpop.f32.mrf.mxu0
    %v1173 = vadd.f32 %v1153, %v1172
    %1174 = vdwg.mxu0
    %1175 = vmatpush.msra.mxu0 %v746
    %1176 = vmatpush.msra.mxu0 %v744
    %1177 = vmatpush.msra.mxu0 %v742
    %1178 = vmatpush.msra.mxu0 %v740
    %1179 = vmatpush.msra.mxu0 %v738
    %1180 = vmatpush.msra.mxu0 %v736
    %1181 = vmatpush.msra.mxu0 %v734
    %1182 = vmatpush.msra.mxu0 %v732
    %1183 = vmatpush.msra.mxu0 %v730
    %1184 = vmatpush.msra.mxu0 %v728
    %1185 = vmatpush.msra.mxu0 %v726
    %1186 = vmatpush.msra.mxu0 %v724
    %1187 = vmatpush.msra.mxu0 %v722
    %1188 = vmatpush.msra.mxu0 %v720
    %1189 = vmatpush.msra.mxu0 %v718
    %1190 = vmatpush.msra.mxu0 %v716
    %1191 = vmatmul.f32.gmra.mxu0 %v550
    %v1192 = vpop.f32.mrf.mxu0
    %v1193 = vadd.f32 %v1173, %v1192
    %1194 = vdwg.mxu0
    %1195 = vmatpush.msra.mxu0 %v778
    %1196 = vmatpush.msra.mxu0 %v776
    %1197 = vmatpush.msra.mxu0 %v774
    %1198 = vmatpush.msra.mxu0 %v772
    %1199 = vmatpush.msra.mxu0 %v770
    %1200 = vmatpush.msra.mxu0 %v768
    %1201 = vmatpush.msra.mxu0 %v766
    %1202 = vmatpush.msra.mxu0 %v764
    %1203 = vmatpush.msra.mxu0 %v762
    %1204 = vmatpush.msra.mxu0 %v760
    %1205 = vmatpush.msra.mxu0 %v758
    %1206 = vmatpush.msra.mxu0 %v756
    %1207 = vmatpush.msra.mxu0 %v754
    %1208 = vmatpush.msra.mxu0 %v752
    %1209 = vmatpush.msra.mxu0 %v750
    %1210 = vmatpush.msra.mxu0 %v748
    %1211 = vmatmul.f32.gmra.mxu0 %v551
    %v1212 = vpop.f32.mrf.mxu0
    %v1213 = vadd.f32 %v1193, %v1212
    %1214 = vdwg.mxu0
    %1215 = vmatpush.msra.mxu0 %v810
    %1216 = vmatpush.msra.mxu0 %v808
    %1217 = vmatpush.msra.mxu0 %v806
    %1218 = vmatpush.msra.mxu0 %v804
    %1219 = vmatpush.msra.mxu0 %v802
    %1220 = vmatpush.msra.mxu0 %v800
    %1221 = vmatpush.msra.mxu0 %v798
    %1222 = vmatpush.msra.mxu0 %v796
    %1223 = vmatpush.msra.mxu0 %v794
    %1224 = vmatpush.msra.mxu0 %v792
    %1225 = vmatpush.msra.mxu0 %v790
    %1226 = vmatpush.msra.mxu0 %v788
    %1227 = vmatpush.msra.mxu0 %v786
    %1228 = vmatpush.msra.mxu0 %v784
    %1229 = vmatpush.msra.mxu0 %v782
    %1230 = vmatpush.msra.mxu0 %v780
    %1231 = vmatmul.f32.gmra.mxu0 %v552
    %v1232 = vpop.f32.mrf.mxu0
    %v1233 = vadd.f32 %v1213, %v1232
    %1234 = vdwg.mxu0
    %1235 = vmatpush.msra.mxu0 %v842
    %1236 = vmatpush.msra.mxu0 %v840
    %1237 = vmatpush.msra.mxu0 %v838
    %1238 = vmatpush.msra.mxu0 %v836
    %1239 = vmatpush.msra.mxu0 %v834
    %1240 = vmatpush.msra.mxu0 %v832
    %1241 = vmatpush.msra.mxu0 %v830
    %1242 = vmatpush.msra.mxu0 %v828
    %1243 = vmatpush.msra.mxu0 %v826
    %1244 = vmatpush.msra.mxu0 %v824
    %1245 = vmatpush.msra.mxu0 %v822
    %1246 = vmatpush.msra.mxu0 %v820
    %1247 = vmatpush.msra.mxu0 %v818
    %1248 = vmatpush.msra.mxu0 %v816
    %1249 = vmatpush.msra.mxu0 %v814
    %1250 = vmatpush.msra.mxu0 %v812
    %1251 = vmatmul.f32.gmra.mxu0 %v553
    %v1252 = vpop.f32.mrf.mxu0
    %v1253 = vadd.f32 %v1233, %v1252
    %1254 = vdwg.mxu0
    %1255 = vmatpush.msra.mxu0 %v874
    %1256 = vmatpush.msra.mxu0 %v872
    %1257 = vmatpush.msra.mxu0 %v870
    %1258 = vmatpush.msra.mxu0 %v868
    %1259 = vmatpush.msra.mxu0 %v866
    %1260 = vmatpush.msra.mxu0 %v864
    %1261 = vmatpush.msra.mxu0 %v862
    %1262 = vmatpush.msra.mxu0 %v860
    %1263 = vmatpush.msra.mxu0 %v858
    %1264 = vmatpush.msra.mxu0 %v856
    %1265 = vmatpush.msra.mxu0 %v854
    %1266 = vmatpush.msra.mxu0 %v852
    %1267 = vmatpush.msra.mxu0 %v850
    %1268 = vmatpush.msra.mxu0 %v848
    %1269 = vmatpush.msra.mxu0 %v846
    %1270 = vmatpush.msra.mxu0 %v844
    %1271 = vmatmul.f32.gmra.mxu0 %v554
    %v1272 = vpop.f32.mrf.mxu0
    %v1273 = vadd.f32 %v1253, %v1272
    %1274 = vdwg.mxu0
    %v1275 = vld [vmem:[#allocation9] sm:$0x3]
    %v1277 = vperm.slane %v1275, 0
    %v1278 = vperm.slane %v1275, 1
    %v1281 = vmul.f32 %v1073, %v1277
    %v1282 = vmul.f32 %v1273, %v1278
    %v1283 = vld [vmem:[#allocation10] sm:$0x3]
    %v1285 = vperm.slane %v1283, 0
    %v1286 = vperm.slane %v1283, 1
    %v1289 = vadd.f32 %v1281, %v1285
    %v1290 = vadd.f32 %v1282, %v1286
    %v1291 = vmax.f32 %v1289, 0.0
    %v1292 = vmax.f32 %v1290, 0.0
    %v1293 = vld [vmem:[#allocation12] sm:$0xff]
    %v1294 = vld [vmem:[#allocation12 + $0x8] sm:$0xff]
    %v1295 = vld [vmem:[#allocation12 + $0x10] sm:$0xff]
    %v1296 = vld [vmem:[#allocation12 + $0x18] sm:$0xff]
    %v1297 = vld [vmem:[#allocation12 + $0x20] sm:$0xff]
    %v1298 = vld [vmem:[#allocation12 + $0x28] sm:$0xff]
    %v1299 = vld [vmem:[#allocation12 + $0x30] sm:$0xff]
    %v1300 = vld [vmem:[#allocation12 + $0x38] sm:$0xff]
    %v1301 = vld [vmem:[#allocation12 + $0x40] sm:$0xff]
    %v1302 = vld [vmem:[#allocation12 + $0x48] sm:$0xff]
    %v1303 = vld [vmem:[#allocation12 + $0x50] sm:$0xff]
    %v1304 = vld [vmem:[#allocation12 + $0x58] sm:$0xff]
    %v1305 = vld [vmem:[#allocation12 + $0x60] sm:$0xff]
    %v1306 = vld [vmem:[#allocation12 + $0x68] sm:$0xff]
    %v1307 = vld [vmem:[#allocation12 + $0x70] sm:$0xff]
    %v1308 = vld [vmem:[#allocation12 + $0x78] sm:$0xff]
    %v1309 = vld [vmem:[#allocation12 + $0x80] sm:$0xff]
    %v1310 = vld [vmem:[#allocation12 + $0x88] sm:$0xff]
    %v1311 = vld [vmem:[#allocation12 + $0x90] sm:$0xff]
    %v1312 = vld [vmem:[#allocation12 + $0x98] sm:$0xff]
    %v1313 = vld [vmem:[#allocation12 + $0xa0] sm:$0xff]
    %v1314 = vld [vmem:[#allocation12 + $0xa8] sm:$0xff]
    %v1315 = vld [vmem:[#allocation12 + $0xb0] sm:$0xff]
    %v1316 = vld [vmem:[#allocation12 + $0xb8] sm:$0xff]
    %v1317 = vld [vmem:[#allocation12 + $0xc0] sm:$0xff]
    %v1318 = vld [vmem:[#allocation12 + $0xc8] sm:$0xff]
    %v1319 = vld [vmem:[#allocation12 + $0xd0] sm:$0xff]
    %v1320 = vld [vmem:[#allocation12 + $0xd8] sm:$0xff]
    %v1321 = vld [vmem:[#allocation12 + $0xe0] sm:$0xff]
    %v1322 = vld [vmem:[#allocation12 + $0xe8] sm:$0xff]
    %v1323 = vld [vmem:[#allocation12 + $0xf0] sm:$0xff]
    %v1324 = vld [vmem:[#allocation12 + $0xf8] sm:$0xff]
    %v1325 = vld [vmem:[#allocation12 + $0x100] sm:$0xff]
    %v1326 = vld [vmem:[#allocation12 + $0x108] sm:$0xff]
    %v1327 = vld [vmem:[#allocation12 + $0x110] sm:$0xff]
    %v1328 = vld [vmem:[#allocation12 + $0x118] sm:$0xff]
    %v1329 = vld [vmem:[#allocation12 + $0x120] sm:$0xff]
    %v1330 = vld [vmem:[#allocation12 + $0x128] sm:$0xff]
    %v1331 = vld [vmem:[#allocation12 + $0x130] sm:$0xff]
    %v1332 = vld [vmem:[#allocation12 + $0x138] sm:$0xff]
    %v1333 = vld [vmem:[#allocation12 + $0x140] sm:$0xff]
    %v1334 = vld [vmem:[#allocation12 + $0x148] sm:$0xff]
    %v1335 = vld [vmem:[#allocation12 + $0x150] sm:$0xff]
    %v1336 = vld [vmem:[#allocation12 + $0x158] sm:$0xff]
    %v1337 = vld [vmem:[#allocation12 + $0x160] sm:$0xff]
    %v1338 = vld [vmem:[#allocation12 + $0x168] sm:$0xff]
    %v1339 = vld [vmem:[#allocation12 + $0x170] sm:$0xff]
    %v1340 = vld [vmem:[#allocation12 + $0x178] sm:$0xff]
    %v1341 = vld [vmem:[#allocation12 + $0x180] sm:$0xff]
    %v1342 = vld [vmem:[#allocation12 + $0x188] sm:$0xff]
    %v1343 = vld [vmem:[#allocation12 + $0x190] sm:$0xff]
    %v1344 = vld [vmem:[#allocation12 + $0x198] sm:$0xff]
    %v1345 = vld [vmem:[#allocation12 + $0x1a0] sm:$0xff]
    %v1346 = vld [vmem:[#allocation12 + $0x1a8] sm:$0xff]
    %v1347 = vld [vmem:[#allocation12 + $0x1b0] sm:$0xff]
    %v1348 = vld [vmem:[#allocation12 + $0x1b8] sm:$0xff]
    %v1349 = vld [vmem:[#allocation12 + $0x1c0] sm:$0xff]
    %v1350 = vld [vmem:[#allocation12 + $0x1c8] sm:$0xff]
    %v1351 = vld [vmem:[#allocation12 + $0x1d0] sm:$0xff]
    %v1352 = vld [vmem:[#allocation12 + $0x1d8] sm:$0xff]
    %v1353 = vld [vmem:[#allocation12 + $0x1e0] sm:$0xff]
    %v1354 = vld [vmem:[#allocation12 + $0x1e8] sm:$0xff]
    %v1355 = vld [vmem:[#allocation12 + $0x1f0] sm:$0xff]
    %v1356 = vld [vmem:[#allocation12 + $0x1f8] sm:$0xff]
    %v1357 = vld [vmem:[#allocation12 + $0x200] sm:$0xff]
    %v1358 = vld [vmem:[#allocation12 + $0x208] sm:$0xff]
    %v1359 = vld [vmem:[#allocation12 + $0x210] sm:$0xff]
    %v1360 = vld [vmem:[#allocation12 + $0x218] sm:$0xff]
    %v1361 = vld [vmem:[#allocation12 + $0x220] sm:$0xff]
    %v1362 = vld [vmem:[#allocation12 + $0x228] sm:$0xff]
    %v1363 = vld [vmem:[#allocation12 + $0x230] sm:$0xff]
    %v1364 = vld [vmem:[#allocation12 + $0x238] sm:$0xff]
    %v1365 = vld [vmem:[#allocation12 + $0x240] sm:$0xff]
    %v1366 = vld [vmem:[#allocation12 + $0x248] sm:$0xff]
    %v1367 = vld [vmem:[#allocation12 + $0x250] sm:$0xff]
    %v1368 = vld [vmem:[#allocation12 + $0x258] sm:$0xff]
    %v1369 = vld [vmem:[#allocation12 + $0x260] sm:$0xff]
    %v1370 = vld [vmem:[#allocation12 + $0x268] sm:$0xff]
    %v1371 = vld [vmem:[#allocation12 + $0x270] sm:$0xff]
    %v1372 = vld [vmem:[#allocation12 + $0x278] sm:$0xff]
    %v1373 = vld [vmem:[#allocation12 + $0x280] sm:$0xff]
    %v1374 = vld [vmem:[#allocation12 + $0x288] sm:$0xff]
    %v1375 = vld [vmem:[#allocation12 + $0x290] sm:$0xff]
    %v1376 = vld [vmem:[#allocation12 + $0x298] sm:$0xff]
    %v1377 = vld [vmem:[#allocation12 + $0x2a0] sm:$0xff]
    %v1378 = vld [vmem:[#allocation12 + $0x2a8] sm:$0xff]
    %v1379 = vld [vmem:[#allocation12 + $0x2b0] sm:$0xff]
    %v1380 = vld [vmem:[#allocation12 + $0x2b8] sm:$0xff]
    %v1381 = vld [vmem:[#allocation12 + $0x2c0] sm:$0xff]
    %v1382 = vld [vmem:[#allocation12 + $0x2c8] sm:$0xff]
    %v1383 = vld [vmem:[#allocation12 + $0x2d0] sm:$0xff]
    %v1384 = vld [vmem:[#allocation12 + $0x2d8] sm:$0xff]
    %v1385 = vld [vmem:[#allocation12 + $0x2e0] sm:$0xff]
    %v1386 = vld [vmem:[#allocation12 + $0x2e8] sm:$0xff]
    %v1387 = vld [vmem:[#allocation12 + $0x2f0] sm:$0xff]
    %v1388 = vld [vmem:[#allocation12 + $0x2f8] sm:$0xff]
    %v1389 = vld [vmem:[#allocation12 + $0x300] sm:$0xff]
    %v1390 = vld [vmem:[#allocation12 + $0x308] sm:$0xff]
    %v1391 = vld [vmem:[#allocation12 + $0x310] sm:$0xff]
    %v1392 = vld [vmem:[#allocation12 + $0x318] sm:$0xff]
    %v1393 = vld [vmem:[#allocation12 + $0x320] sm:$0xff]
    %v1394 = vld [vmem:[#allocation12 + $0x328] sm:$0xff]
    %v1395 = vld [vmem:[#allocation12 + $0x330] sm:$0xff]
    %v1396 = vld [vmem:[#allocation12 + $0x338] sm:$0xff]
    %v1397 = vld [vmem:[#allocation12 + $0x340] sm:$0xff]
    %v1398 = vld [vmem:[#allocation12 + $0x348] sm:$0xff]
    %v1399 = vld [vmem:[#allocation12 + $0x350] sm:$0xff]
    %v1400 = vld [vmem:[#allocation12 + $0x358] sm:$0xff]
    %v1401 = vld [vmem:[#allocation12 + $0x360] sm:$0xff]
    %v1402 = vld [vmem:[#allocation12 + $0x368] sm:$0xff]
    %v1403 = vld [vmem:[#allocation12 + $0x370] sm:$0xff]
    %v1404 = vld [vmem:[#allocation12 + $0x378] sm:$0xff]
    %v1405 = vld [vmem:[#allocation12 + $0x380] sm:$0xff]
    %v1406 = vld [vmem:[#allocation12 + $0x388] sm:$0xff]
    %v1407 = vld [vmem:[#allocation12 + $0x390] sm:$0xff]
    %v1408 = vld [vmem:[#allocation12 + $0x398] sm:$0xff]
    %v1409 = vld [vmem:[#allocation12 + $0x3a0] sm:$0xff]
    %v1410 = vld [vmem:[#allocation12 + $0x3a8] sm:$0xff]
    %v1411 = vld [vmem:[#allocation12 + $0x3b0] sm:$0xff]
    %v1412 = vld [vmem:[#allocation12 + $0x3b8] sm:$0xff]
    %v1413 = vld [vmem:[#allocation12 + $0x3c0] sm:$0xff]
    %v1414 = vld [vmem:[#allocation12 + $0x3c8] sm:$0xff]
    %v1415 = vld [vmem:[#allocation12 + $0x3d0] sm:$0xff]
    %v1416 = vld [vmem:[#allocation12 + $0x3d8] sm:$0xff]
    %v1417 = vld [vmem:[#allocation12 + $0x3e0] sm:$0xff]
    %v1418 = vld [vmem:[#allocation12 + $0x3e8] sm:$0xff]
    %v1419 = vld [vmem:[#allocation12 + $0x3f0] sm:$0xff]
    %v1420 = vld [vmem:[#allocation12 + $0x3f8] sm:$0xff]
    %v1421 = vld [vmem:[#allocation13] sm:$0xf]
    %v1423 = vperm.slane %v1421, 0
    %v1424 = vperm.slane %v1421, 1
    %v1425 = vperm.slane %v1421, 2
    %v1426 = vperm.slane %v1421, 3
    %1431 = vmatpush.msra.mxu0 %v1353
    %1432 = vmatpush.msra.mxu0 %v1349
    %1433 = vmatpush.msra.mxu0 %v1345
    %1434 = vmatpush.msra.mxu0 %v1341
    %1435 = vmatpush.msra.mxu0 %v1337
    %1436 = vmatpush.msra.mxu0 %v1333
    %1437 = vmatpush.msra.mxu0 %v1329
    %1438 = vmatpush.msra.mxu0 %v1325
    %1439 = vmatpush.msra.mxu0 %v1321
    %1440 = vmatpush.msra.mxu0 %v1317
    %1441 = vmatpush.msra.mxu0 %v1313
    %1442 = vmatpush.msra.mxu0 %v1309
    %1443 = vmatpush.msra.mxu0 %v1305
    %1444 = vmatpush.msra.mxu0 %v1301
    %1445 = vmatpush.msra.mxu0 %v1297
    %1446 = vmatpush.msra.mxu0 %v1293
    %1447 = vmatmul.f32.gmra.mxu0 %v1291
    %v1448 = vpop.f32.mrf.mxu0
    %v1449 = vadd.f32 %v1423, %v1448
    %1450 = vdwg.mxu0
    %1451 = vmatpush.msra.mxu0 %v1417
    %1452 = vmatpush.msra.mxu0 %v1413
    %1453 = vmatpush.msra.mxu0 %v1409
    %1454 = vmatpush.msra.mxu0 %v1405
    %1455 = vmatpush.msra.mxu0 %v1401
    %1456 = vmatpush.msra.mxu0 %v1397
    %1457 = vmatpush.msra.mxu0 %v1393
    %1458 = vmatpush.msra.mxu0 %v1389
    %1459 = vmatpush.msra.mxu0 %v1385
    %1460 = vmatpush.msra.mxu0 %v1381
    %1461 = vmatpush.msra.mxu0 %v1377
    %1462 = vmatpush.msra.mxu0 %v1373
    %1463 = vmatpush.msra.mxu0 %v1369
    %1464 = vmatpush.msra.mxu0 %v1365
    %1465 = vmatpush.msra.mxu0 %v1361
    %1466 = vmatpush.msra.mxu0 %v1357
    %1467 = vmatmul.f32.gmra.mxu0 %v1292
    %v1468 = vpop.f32.mrf.mxu0
    %v1469 = vadd.f32 %v1449, %v1468
    %1470 = vdwg.mxu0
    %1471 = vmatpush.msra.mxu0 %v1354
    %1472 = vmatpush.msra.mxu0 %v1350
    %1473 = vmatpush.msra.mxu0 %v1346
    %1474 = vmatpush.msra.mxu0 %v1342
    %1475 = vmatpush.msra.mxu0 %v1338
    %1476 = vmatpush.msra.mxu0 %v1334
    %1477 = vmatpush.msra.mxu0 %v1330
    %1478 = vmatpush.msra.mxu0 %v1326
    %1479 = vmatpush.msra.mxu0 %v1322
    %1480 = vmatpush.msra.mxu0 %v1318
    %1481 = vmatpush.msra.mxu0 %v1314
    %1482 = vmatpush.msra.mxu0 %v1310
    %1483 = vmatpush.msra.mxu0 %v1306
    %1484 = vmatpush.msra.mxu0 %v1302
    %1485 = vmatpush.msra.mxu0 %v1298
    %1486 = vmatpush.msra.mxu0 %v1294
    %1487 = vmatmul.f32.gmra.mxu0 %v1291
    %v1488 = vpop.f32.mrf.mxu0
    %v1489 = vadd.f32 %v1424, %v1488
    %1490 = vdwg.mxu0
    %1491 = vmatpush.msra.mxu0 %v1418
    %1492 = vmatpush.msra.mxu0 %v1414
    %1493 = vmatpush.msra.mxu0 %v1410
    %1494 = vmatpush.msra.mxu0 %v1406
    %1495 = vmatpush.msra.mxu0 %v1402
    %1496 = vmatpush.msra.mxu0 %v1398
    %1497 = vmatpush.msra.mxu0 %v1394
    %1498 = vmatpush.msra.mxu0 %v1390
    %1499 = vmatpush.msra.mxu0 %v1386
    %1500 = vmatpush.msra.mxu0 %v1382
    %1501 = vmatpush.msra.mxu0 %v1378
    %1502 = vmatpush.msra.mxu0 %v1374
    %1503 = vmatpush.msra.mxu0 %v1370
    %1504 = vmatpush.msra.mxu0 %v1366
    %1505 = vmatpush.msra.mxu0 %v1362
    %1506 = vmatpush.msra.mxu0 %v1358
    %1507 = vmatmul.f32.gmra.mxu0 %v1292
    %v1508 = vpop.f32.mrf.mxu0
    %v1509 = vadd.f32 %v1489, %v1508
    %1510 = vdwg.mxu0
    %1511 = vmatpush.msra.mxu0 %v1355
    %1512 = vmatpush.msra.mxu0 %v1351
    %1513 = vmatpush.msra.mxu0 %v1347
    %1514 = vmatpush.msra.mxu0 %v1343
    %1515 = vmatpush.msra.mxu0 %v1339
    %1516 = vmatpush.msra.mxu0 %v1335
    %1517 = vmatpush.msra.mxu0 %v1331
    %1518 = vmatpush.msra.mxu0 %v1327
    %1519 = vmatpush.msra.mxu0 %v1323
    %1520 = vmatpush.msra.mxu0 %v1319
    %1521 = vmatpush.msra.mxu0 %v1315
    %1522 = vmatpush.msra.mxu0 %v1311
    %1523 = vmatpush.msra.mxu0 %v1307
    %1524 = vmatpush.msra.mxu0 %v1303
    %1525 = vmatpush.msra.mxu0 %v1299
    %1526 = vmatpush.msra.mxu0 %v1295
    %1527 = vmatmul.f32.gmra.mxu0 %v1291
    %v1528 = vpop.f32.mrf.mxu0
    %v1529 = vadd.f32 %v1425, %v1528
    %1530 = vdwg.mxu0
    %1531 = vmatpush.msra.mxu0 %v1419
    %1532 = vmatpush.msra.mxu0 %v1415
    %1533 = vmatpush.msra.mxu0 %v1411
    %1534 = vmatpush.msra.mxu0 %v1407
    %1535 = vmatpush.msra.mxu0 %v1403
    %1536 = vmatpush.msra.mxu0 %v1399
    %1537 = vmatpush.msra.mxu0 %v1395
    %1538 = vmatpush.msra.mxu0 %v1391
    %1539 = vmatpush.msra.mxu0 %v1387
    %1540 = vmatpush.msra.mxu0 %v1383
    %1541 = vmatpush.msra.mxu0 %v1379
    %1542 = vmatpush.msra.mxu0 %v1375
    %1543 = vmatpush.msra.mxu0 %v1371
    %1544 = vmatpush.msra.mxu0 %v1367
    %1545 = vmatpush.msra.mxu0 %v1363
    %1546 = vmatpush.msra.mxu0 %v1359
    %1547 = vmatmul.f32.gmra.mxu0 %v1292
    %v1548 = vpop.f32.mrf.mxu0
    %v1549 = vadd.f32 %v1529, %v1548
    %1550 = vdwg.mxu0
    %1551 = vmatpush.msra.mxu0 %v1356
    %1552 = vmatpush.msra.mxu0 %v1352
    %1553 = vmatpush.msra.mxu0 %v1348
    %1554 = vmatpush.msra.mxu0 %v1344
    %1555 = vmatpush.msra.mxu0 %v1340
    %1556 = vmatpush.msra.mxu0 %v1336
    %1557 = vmatpush.msra.mxu0 %v1332
    %1558 = vmatpush.msra.mxu0 %v1328
    %1559 = vmatpush.msra.mxu0 %v1324
    %1560 = vmatpush.msra.mxu0 %v1320
    %1561 = vmatpush.msra.mxu0 %v1316
    %1562 = vmatpush.msra.mxu0 %v1312
    %1563 = vmatpush.msra.mxu0 %v1308
    %1564 = vmatpush.msra.mxu0 %v1304
    %1565 = vmatpush.msra.mxu0 %v1300
    %1566 = vmatpush.msra.mxu0 %v1296
    %1567 = vmatmul.f32.gmra.mxu0 %v1291
    %v1568 = vpop.f32.mrf.mxu0
    %v1569 = vadd.f32 %v1426, %v1568
    %1570 = vdwg.mxu0
    %1571 = vmatpush.msra.mxu0 %v1420
    %1572 = vmatpush.msra.mxu0 %v1416
    %1573 = vmatpush.msra.mxu0 %v1412
    %1574 = vmatpush.msra.mxu0 %v1408
    %1575 = vmatpush.msra.mxu0 %v1404
    %1576 = vmatpush.msra.mxu0 %v1400
    %1577 = vmatpush.msra.mxu0 %v1396
    %1578 = vmatpush.msra.mxu0 %v1392
    %1579 = vmatpush.msra.mxu0 %v1388
    %1580 = vmatpush.msra.mxu0 %v1384
    %1581 = vmatpush.msra.mxu0 %v1380
    %1582 = vmatpush.msra.mxu0 %v1376
    %1583 = vmatpush.msra.mxu0 %v1372
    %1584 = vmatpush.msra.mxu0 %v1368
    %1585 = vmatpush.msra.mxu0 %v1364
    %1586 = vmatpush.msra.mxu0 %v1360
    %1587 = vmatmul.f32.gmra.mxu0 %v1292
    %v1588 = vpop.f32.mrf.mxu0
    %v1589 = vadd.f32 %v1569, %v1588
    %1590 = vdwg.mxu0
    %v1591 = vmax.f32 %v1469, 0.0
    %v1592 = vmax.f32 %v1509, 0.0
    %v1593 = vmax.f32 %v1549, 0.0
    %v1594 = vmax.f32 %v1589, 0.0
    %v1595 = vld [vmem:[#allocation15] sm:$0xff]
    %v1596 = vld [vmem:[#allocation15 + $0x8] sm:$0xff]
    %v1597 = vld [vmem:[#allocation15 + $0x10] sm:$0xff]
    %v1598 = vld [vmem:[#allocation15 + $0x18] sm:$0xff]
    %v1599 = vld [vmem:[#allocation15 + $0x20] sm:$0xff]
    %v1600 = vld [vmem:[#allocation15 + $0x28] sm:$0xff]
    %v1601 = vld [vmem:[#allocation15 + $0x30] sm:$0xff]
    %v1602 = vld [vmem:[#allocation15 + $0x38] sm:$0xff]
    %v1603 = vld [vmem:[#allocation15 + $0x40] sm:$0xff]
    %v1604 = vld [vmem:[#allocation15 + $0x48] sm:$0xff]
    %v1605 = vld [vmem:[#allocation15 + $0x50] sm:$0xff]
    %v1606 = vld [vmem:[#allocation15 + $0x58] sm:$0xff]
    %v1607 = vld [vmem:[#allocation15 + $0x60] sm:$0xff]
    %v1608 = vld [vmem:[#allocation15 + $0x68] sm:$0xff]
    %v1609 = vld [vmem:[#allocation15 + $0x70] sm:$0xff]
    %v1610 = vld [vmem:[#allocation15 + $0x78] sm:$0xff]
    %v1611 = vld [vmem:[#allocation15 + $0x80] sm:$0xff]
    %v1612 = vld [vmem:[#allocation15 + $0x88] sm:$0xff]
    %v1613 = vld [vmem:[#allocation15 + $0x90] sm:$0xff]
    %v1614 = vld [vmem:[#allocation15 + $0x98] sm:$0xff]
    %v1615 = vld [vmem:[#allocation15 + $0xa0] sm:$0xff]
    %v1616 = vld [vmem:[#allocation15 + $0xa8] sm:$0xff]
    %v1617 = vld [vmem:[#allocation15 + $0xb0] sm:$0xff]
    %v1618 = vld [vmem:[#allocation15 + $0xb8] sm:$0xff]
    %v1619 = vld [vmem:[#allocation15 + $0xc0] sm:$0xff]
    %v1620 = vld [vmem:[#allocation15 + $0xc8] sm:$0xff]
    %v1621 = vld [vmem:[#allocation15 + $0xd0] sm:$0xff]
    %v1622 = vld [vmem:[#allocation15 + $0xd8] sm:$0xff]
    %v1623 = vld [vmem:[#allocation15 + $0xe0] sm:$0xff]
    %v1624 = vld [vmem:[#allocation15 + $0xe8] sm:$0xff]
    %v1625 = vld [vmem:[#allocation15 + $0xf0] sm:$0xff]
    %v1626 = vld [vmem:[#allocation15 + $0xf8] sm:$0xff]
    %v1627 = vld [vmem:[#allocation15 + $0x100] sm:$0xff]
    %v1628 = vld [vmem:[#allocation15 + $0x108] sm:$0xff]
    %v1629 = vld [vmem:[#allocation15 + $0x110] sm:$0xff]
    %v1630 = vld [vmem:[#allocation15 + $0x118] sm:$0xff]
    %v1631 = vld [vmem:[#allocation15 + $0x120] sm:$0xff]
    %v1632 = vld [vmem:[#allocation15 + $0x128] sm:$0xff]
    %v1633 = vld [vmem:[#allocation15 + $0x130] sm:$0xff]
    %v1634 = vld [vmem:[#allocation15 + $0x138] sm:$0xff]
    %v1635 = vld [vmem:[#allocation15 + $0x140] sm:$0xff]
    %v1636 = vld [vmem:[#allocation15 + $0x148] sm:$0xff]
    %v1637 = vld [vmem:[#allocation15 + $0x150] sm:$0xff]
    %v1638 = vld [vmem:[#allocation15 + $0x158] sm:$0xff]
    %v1639 = vld [vmem:[#allocation15 + $0x160] sm:$0xff]
    %v1640 = vld [vmem:[#allocation15 + $0x168] sm:$0xff]
    %v1641 = vld [vmem:[#allocation15 + $0x170] sm:$0xff]
    %v1642 = vld [vmem:[#allocation15 + $0x178] sm:$0xff]
    %v1643 = vld [vmem:[#allocation15 + $0x180] sm:$0xff]
    %v1644 = vld [vmem:[#allocation15 + $0x188] sm:$0xff]
    %v1645 = vld [vmem:[#allocation15 + $0x190] sm:$0xff]
    %v1646 = vld [vmem:[#allocation15 + $0x198] sm:$0xff]
    %v1647 = vld [vmem:[#allocation15 + $0x1a0] sm:$0xff]
    %v1648 = vld [vmem:[#allocation15 + $0x1a8] sm:$0xff]
    %v1649 = vld [vmem:[#allocation15 + $0x1b0] sm:$0xff]
    %v1650 = vld [vmem:[#allocation15 + $0x1b8] sm:$0xff]
    %v1651 = vld [vmem:[#allocation15 + $0x1c0] sm:$0xff]
    %v1652 = vld [vmem:[#allocation15 + $0x1c8] sm:$0xff]
    %v1653 = vld [vmem:[#allocation15 + $0x1d0] sm:$0xff]
    %v1654 = vld [vmem:[#allocation15 + $0x1d8] sm:$0xff]
    %v1655 = vld [vmem:[#allocation15 + $0x1e0] sm:$0xff]
    %v1656 = vld [vmem:[#allocation15 + $0x1e8] sm:$0xff]
    %v1657 = vld [vmem:[#allocation15 + $0x1f0] sm:$0xff]
    %v1658 = vld [vmem:[#allocation15 + $0x1f8] sm:$0xff]
    %v1659 = vld [vmem:[#allocation16] sm:$0x1]
    %v1661 = vperm.slane %v1659, 0
    %1663 = vmatpush.msra.mxu0 %v1610
    %1664 = vmatpush.msra.mxu0 %v1609
    %1665 = vmatpush.msra.mxu0 %v1608
    %1666 = vmatpush.msra.mxu0 %v1607
    %1667 = vmatpush.msra.mxu0 %v1606
    %1668 = vmatpush.msra.mxu0 %v1605
    %1669 = vmatpush.msra.mxu0 %v1604
    %1670 = vmatpush.msra.mxu0 %v1603
    %1671 = vmatpush.msra.mxu0 %v1602
    %1672 = vmatpush.msra.mxu0 %v1601
    %1673 = vmatpush.msra.mxu0 %v1600
    %1674 = vmatpush.msra.mxu0 %v1599
    %1675 = vmatpush.msra.mxu0 %v1598
    %1676 = vmatpush.msra.mxu0 %v1597
    %1677 = vmatpush.msra.mxu0 %v1596
    %1678 = vmatpush.msra.mxu0 %v1595
    %1679 = vmatmul.f32.gmra.mxu0 %v1591
    %v1680 = vpop.f32.mrf.mxu0
    %v1681 = vadd.f32 %v1661, %v1680
    %1682 = vdwg.mxu0
    %1683 = vmatpush.msra.mxu0 %v1626
    %1684 = vmatpush.msra.mxu0 %v1625
    %1685 = vmatpush.msra.mxu0 %v1624
    %1686 = vmatpush.msra.mxu0 %v1623
    %1687 = vmatpush.msra.mxu0 %v1622
    %1688 = vmatpush.msra.mxu0 %v1621
    %1689 = vmatpush.msra.mxu0 %v1620
    %1690 = vmatpush.msra.mxu0 %v1619
    %1691 = vmatpush.msra.mxu0 %v1618
    %1692 = vmatpush.msra.mxu0 %v1617
    %1693 = vmatpush.msra.mxu0 %v1616
    %1694 = vmatpush.msra.mxu0 %v1615
    %1695 = vmatpush.msra.mxu0 %v1614
    %1696 = vmatpush.msra.mxu0 %v1613
    %1697 = vmatpush.msra.mxu0 %v1612
    %1698 = vmatpush.msra.mxu0 %v1611
    %1699 = vmatmul.f32.gmra.mxu0 %v1592
    %v1700 = vpop.f32.mrf.mxu0
    %v1701 = vadd.f32 %v1681, %v1700
    %1702 = vdwg.mxu0
    %1703 = vmatpush.msra.mxu0 %v1642
    %1704 = vmatpush.msra.mxu0 %v1641
    %1705 = vmatpush.msra.mxu0 %v1640
    %1706 = vmatpush.msra.mxu0 %v1639
    %1707 = vmatpush.msra.mxu0 %v1638
    %1708 = vmatpush.msra.mxu0 %v1637
    %1709 = vmatpush.msra.mxu0 %v1636
    %1710 = vmatpush.msra.mxu0 %v1635
    %1711 = vmatpush.msra.mxu0 %v1634
    %1712 = vmatpush.msra.mxu0 %v1633
    %1713 = vmatpush.msra.mxu0 %v1632
    %1714 = vmatpush.msra.mxu0 %v1631
    %1715 = vmatpush.msra.mxu0 %v1630
    %1716 = vmatpush.msra.mxu0 %v1629
    %1717 = vmatpush.msra.mxu0 %v1628
    %1718 = vmatpush.msra.mxu0 %v1627
    %1719 = vmatmul.f32.gmra.mxu0 %v1593
    %v1720 = vpop.f32.mrf.mxu0
    %v1721 = vadd.f32 %v1701, %v1720
    %1722 = vdwg.mxu0
    %1723 = vmatpush.msra.mxu0 %v1658
    %1724 = vmatpush.msra.mxu0 %v1657
    %1725 = vmatpush.msra.mxu0 %v1656
    %1726 = vmatpush.msra.mxu0 %v1655
    %1727 = vmatpush.msra.mxu0 %v1654
    %1728 = vmatpush.msra.mxu0 %v1653
    %1729 = vmatpush.msra.mxu0 %v1652
    %1730 = vmatpush.msra.mxu0 %v1651
    %1731 = vmatpush.msra.mxu0 %v1650
    %1732 = vmatpush.msra.mxu0 %v1649
    %1733 = vmatpush.msra.mxu0 %v1648
    %1734 = vmatpush.msra.mxu0 %v1647
    %1735 = vmatpush.msra.mxu0 %v1646
    %1736 = vmatpush.msra.mxu0 %v1645
    %1737 = vmatpush.msra.mxu0 %v1644
    %1738 = vmatpush.msra.mxu0 %v1643
    %1739 = vmatmul.f32.gmra.mxu0 %v1594
    %v1740 = vpop.f32.mrf.mxu0
    %v1741 = vadd.f32 %v1721, %v1740
    %1742 = vdwg.mxu0
    %1743 = vmax.xlane.f32.xlu0 %v1741
    %v1744 = vpop.xlane.xlu0 %1743
    %v1745 = vsub.f32 %v1741, %v1744
    %v1746 = vmul.f32 %v1745, 1.442695
    %v1747 = vpow.pop %v1746
    %1748 = vadd.xlane.f32.xlu0 %v1747
    %v1749 = vpop.xlane.xlu0 %1748
    %v1750 = vrcp.pop %v1749
    %v1751 = vmul.f32 %v1749, %v1750
    %v1752 = vsub.f32 1.0, %v1751
    %v1753 = vmul.f32 %v1750, %v1752
    %v1754 = vadd.f32 %v1750, %v1753
    %vm1755 = vweird.f32 %v1749
    %vm1756 = vweird.f32 %v1750
    %vm1757 = vmor %vm1755, %vm1756
    %v1758 = vsel %vm1757, %v1750, %v1754
    %v1759 = vand.u32 2147483647, %v1749
    %vm1760 = vcmp.eq.f32.partialorder %v1759, 8.507059e+37
    %v1761 = vand.u32 %v1749, 2147483648
    %v1762 = vor.u32 1.1754944e-38, %v1761
    %v1763 = vsel %vm1760, %v1762, %v1758
    %v1764 = vmul.f32 %v1747, %v1763
    %1765 = vst [vmem:[%s11] sm:$0xff] %v1764
    // Predicated region
    $region86: #{convnet_forward.1} parent=1 // pred_check
      _
    $region87: #{convnet_forward.1} parent=1 // pred_check_branch
      %1767 = sbr.rel (0) target = $region89
    $region88: #{convnet_forward.1} parent=1 // pred_region
      _
    $region89: #{convnet_forward.1} parent=1 // pred_fallthru
      _
    // Predicated region
    $region90: #{convnet_forward.1} parent=1 // pred_check
      _
    $region91: #{convnet_forward.1} parent=1 // pred_check_branch
      %1769 = sbr.rel (0) target = $region93
    $region92: #{convnet_forward.1} parent=1 // pred_region
      _
    $region93: #{convnet_forward.1} parent=1 // pred_fallthru
      _
    %1770 = vsyncpa [#allocation3], 1
    %1771 = vsyncpa [#allocation5], 1
    %1772 = vsyncpa [#allocation8], 1
    %1773 = vsyncpa [#allocation11], 1
    %1774 = vsyncpa [#allocation14], 1
    %1775 = vsyncpa [#allocation17], 1

</llo_original>
